<compile_context>
chip_gen: v5e
topology: v5e:2x2
jax: 0.10.0
libtpu: 0.0.40
codegen_flags: <defaults>
</compile_context>

<pallas_src>
import functools
import math

import jax
import jax.numpy as jnp
from jax.experimental import pallas as pl
from jax.experimental.pallas import tpu as pltpu

LN_EPS = 1e-5
_VMEM_LIMIT = 48 * 1024 * 1024   # raise scoped VMEM above the 16/32 MiB defaults, safe on all gens


def _round_up(x, m):
    return ((x + m - 1) // m) * m


# --------------------------------------------------------------------------------------
# Kernel 1: fused MultiheadAttention + residual + LayerNorm1  (one batch element per step)
# --------------------------------------------------------------------------------------
def _attn_ln_kernel(x_ref, wq_ref, wk_ref, wv_ref, bq_ref, bk_ref, bv_ref,
                    wo_ref, bo_ref, g1_ref, be1_ref, o_ref, *, num_heads, head_dim):
    f32 = jnp.float32
    x = x_ref[0]                                                   # (S, E), native dtype

    # Per-head projections from head-major weights (H, E, Dh): static unroll with
    # leading-dim ref indexing -> no lane-misaligned slices of a fused qkv buffer.
    qs, ks, vs = [], [], []
    for h in range(num_heads):
        qs.append(jnp.dot(x, wq_ref[h], preferred_element_type=f32))
        ks.append(jnp.dot(x, wk_ref[h], preferred_element_type=f32))
        vs.append(jnp.dot(x, wv_ref[h], preferred_element_type=f32))
    q = jnp.stack(qs) + bq_ref[...]                                # (H, S, Dh) f32
    k = jnp.stack(ks) + bk_ref[...]
    v = jnp.stack(vs) + bv_ref[...]

    # Heads as a dot_general batch dim: one batched MXU op per stage instead of H tiny dots.
    scale = 1.0 / math.sqrt(head_dim)
    s = jnp.einsum("hqd,hkd->hqk", q, k, preferred_element_type=f32) * scale
    m = jnp.max(s, axis=-1, keepdims=True)
    e = jnp.exp(s - m)
    # Softmax divide on the EUP (reciprocal) instead of a per-element VPU divide.
    p = e * pl.reciprocal(jnp.sum(e, axis=-1, keepdims=True), approx=True)
    ctx = jnp.einsum("hqk,hkd->hqd", p, v, preferred_element_type=f32)   # (H, S, Dh)

    # Output projection accumulated per head: no (S, H*Dh) concatenate / lane relayout.
    attn = jnp.dot(ctx[0].astype(wo_ref.dtype), wo_ref[0], preferred_element_type=f32)
    for h in range(1, num_heads):
        attn += jnp.dot(ctx[h].astype(wo_ref.dtype), wo_ref[h], preferred_element_type=f32)
    attn += bo_ref[...]

    # Residual + LayerNorm1 (f32 epilogue, one-pass stats, variance clamped >= 0).
    y = x.astype(f32) + attn
    mean = jnp.mean(y, axis=-1, keepdims=True)
    var = jnp.maximum(jnp.mean(y * y, axis=-1, keepdims=True) - mean * mean, 0.0)
    y_n = (y - mean) * jax.lax.rsqrt(var + LN_EPS)
    o_ref[0] = (y_n * g1_ref[...] + be1_ref[...]).astype(o_ref.dtype)


# --------------------------------------------------------------------------------------
# Kernel 2: fused FFN (Linear -> ReLU -> Linear) + residual + LayerNorm2
#           token-row tiles x streamed hidden-dim tiles with an f32 accumulator
# --------------------------------------------------------------------------------------
def _ffn_ln_kernel(y_ref, w1_ref, b1_ref, w2_ref, b2_ref, g2_ref, be2_ref, o_ref, acc_ref):
    k = pl.program_id(1)

    @pl.when(k == 0)
    def _():
        acc_ref[...] = jnp.zeros_like(acc_ref)

    y = y_ref[...]                                                 # (Tm, E), native dtype
    h = jnp.dot(y, w1_ref[...], preferred_element_type=jnp.float32) + b1_ref[...]
    h = jnp.maximum(h, 0.0)                                        # ReLU (exact under k-split)
    acc_ref[...] += jnp.dot(h.astype(w2_ref.dtype), w2_ref[...],
                            preferred_element_type=jnp.float32)

    @pl.when(k == pl.num_programs(1) - 1)
    def _():
        z = y_ref[...].astype(jnp.float32) + acc_ref[...] + b2_ref[...]
        mean = jnp.mean(z, axis=-1, keepdims=True)
        var = jnp.maximum(jnp.mean(z * z, axis=-1, keepdims=True) - mean * mean, 0.0)
        z_n = (z - mean) * jax.lax.rsqrt(var + LN_EPS)
        o_ref[...] = (z_n * g2_ref[...] + be2_ref[...]).astype(o_ref.dtype)


# --------------------------------------------------------------------------------------
# Wrappers
# --------------------------------------------------------------------------------------
def _attention_block(x, p, num_heads):
    batch, seq, embed_dim = x.shape
    head_dim = embed_dim // num_heads
    kernel = functools.partial(_attn_ln_kernel, num_heads=num_heads, head_dim=head_dim)
    full3 = lambda b: (0, 0, 0)
    full2 = lambda b: (0, 0)
    return pl.pallas_call(
        kernel,
        out_shape=jax.ShapeDtypeStruct((batch, seq, embed_dim), x.dtype),
        grid_spec=pltpu.PrefetchScalarGridSpec(
            num_scalar_prefetch=0,
            grid=(batch,),
            in_specs=[
                pl.BlockSpec((1, seq, embed_dim), lambda b: (b, 0, 0)),           # x
                pl.BlockSpec((num_heads, embed_dim, head_dim), full3),            # Wq (H,E,Dh)
                pl.BlockSpec((num_heads, embed_dim, head_dim), full3),            # Wk
                pl.BlockSpec((num_heads, embed_dim, head_dim), full3),            # Wv
                pl.BlockSpec((num_heads, 1, head_dim), full3),                    # bq
                pl.BlockSpec((num_heads, 1, head_dim), full3),                    # bk
                pl.BlockSpec((num_heads, 1, head_dim), full3),                    # bv
                pl.BlockSpec((num_heads, head_dim, embed_dim), full3),            # Wo (H,Dh,E)
                pl.BlockSpec((1, embed_dim), full2),                              # bo
                pl.BlockSpec((1, embed_dim), full2),                              # ln1 gamma
                pl.BlockSpec((1, embed_dim), full2),                              # ln1 beta
            ],
            out_specs=pl.BlockSpec((1, seq, embed_dim), lambda b: (b, 0, 0)),
        ),
        compiler_params=pltpu.CompilerParams(
            dimension_semantics=("parallel",),
            vmem_limit_bytes=_VMEM_LIMIT),
    )(x, p["wq_h"], p["wk_h"], p["wv_h"], p["bq_h"], p["bk_h"], p["bv_h"],
      p["wo_h"], p["b_o"], p["ln1_g"], p["ln1_b"])


def _ffn_block(y, p):
    batch, seq, embed_dim = y.shape
    hidden = p["w1_t"].shape[1]
    rows = batch * seq

    # Dtype-aware sublane rounding (8 rows f32, 16 bf16, 32 int8); grow to 256 rows when big.
    itemsize = jnp.dtype(y.dtype).itemsize
    min_rows = 8 * max(1, 4 // itemsize)
    if rows >= 256:
        row_tile = 256
    elif rows >= 128:
        row_tile = 128
    else:
        row_tile = _round_up(rows, min_rows)

    # Stream the hidden dimension so W1 / W2 are never fully resident in VMEM.
    tk = 512 if (hidden > 512 and hidden % 512 == 0) else hidden

    y2 = y.reshape(rows, embed_dim)                      # free reshape (merge leading dims)
    grid = (pl.cdiv(rows, row_tile), hidden // tk)       # ragged last row block is masked

    out = pl.pallas_call(
        _ffn_ln_kernel,
        out_shape=jax.ShapeDtypeStruct((rows, embed_dim), y.dtype),
        grid_spec=pltpu.PrefetchScalarGridSpec(
            num_scalar_prefetch=0,
            grid=grid,
            in_specs=[
                pl.BlockSpec((row_tile, embed_dim), lambda i, k: (i, 0)),   # token rows
                pl.BlockSpec((embed_dim, tk), lambda i, k: (0, k)),         # W1^T column tile
                pl.BlockSpec((1, tk), lambda i, k: (0, k)),                 # b1 tile
                pl.BlockSpec((tk, embed_dim), lambda i, k: (k, 0)),         # W2^T row tile
                pl.BlockSpec((1, embed_dim), lambda i, k: (0, 0)),          # b2
                pl.BlockSpec((1, embed_dim), lambda i, k: (0, 0)),          # ln2 gamma
                pl.BlockSpec((1, embed_dim), lambda i, k: (0, 0)),          # ln2 beta
            ],
            out_specs=pl.BlockSpec((row_tile, embed_dim), lambda i, k: (i, 0)),
            scratch_shapes=[pltpu.VMEM((row_tile, embed_dim), jnp.float32)],
        ),
        compiler_params=pltpu.CompilerParams(
            dimension_semantics=("parallel", "arbitrary"),
            vmem_limit_bytes=_VMEM_LIMIT),
    )(y2, p["w1_t"], p["b1"], p["w2_t"], p["b2"], p["ln2_g"], p["ln2_b"])
    return out.reshape(batch, seq, embed_dim)


def transformer_encoder_block(x, prepared_params, num_heads):
    y = _attention_block(x, prepared_params, num_heads)
    return _ffn_block(y, prepared_params)


# --------------------------------------------------------------------------------------
# Parameters
# --------------------------------------------------------------------------------------
def init_params(key, embed_dim):
    hidden = 4 * embed_dim
    ks = jax.random.split(key, 6)

    def xavier(k, out_dim, in_dim):
        bound = math.sqrt(6.0 / (in_dim + out_dim))
        return jax.random.uniform(k, (out_dim, in_dim), jnp.float32, -bound, bound)

    def linear_bias(k, out_dim, in_dim):
        bound = 1.0 / math.sqrt(in_dim)
        return jax.random.uniform(k, (out_dim,), jnp.float32, -bound, bound)

    return {
        # nn.MultiheadAttention: in_proj (3E, E) + zero bias, out_proj (E, E) + zero bias
        "w_qkv": xavier(ks[0], 3 * embed_dim, embed_dim),
        "b_qkv": jnp.zeros((3 * embed_dim,), jnp.float32),
        "w_o": xavier(ks[1], embed_dim, embed_dim),
        "b_o": jnp.zeros((embed_dim,), jnp.float32),
        # FFN: Linear(E, 4E) -> ReLU -> Linear(4E, E), xavier_uniform weights
        "w1": xavier(ks[2], hidden, embed_dim),
        "b1": linear_bias(ks[3], hidden, embed_dim),
        "w2": xavier(ks[4], embed_dim, hidden),
        "b2": linear_bias(ks[5], embed_dim, hidden),
        # LayerNorms
        "ln1_g": jnp.ones((embed_dim,), jnp.float32),
        "ln1_b": jnp.zeros((embed_dim,), jnp.float32),
        "ln2_g": jnp.ones((embed_dim,), jnp.float32),
        "ln2_b": jnp.zeros((embed_dim,), jnp.float32),
    }


def prepare_params(raw, num_heads):
    """One-time layout prep (NOT per call): transpose PyTorch (out, in) weights to (in, out),
    split Q/K/V/O into head-major 3-D weights so the kernel never slices lanes per head, and
    keep per-feature vectors 2-D (1, dim)."""
    embed_dim = raw["w_qkv"].shape[1]
    head_dim = embed_dim // num_heads

    w_qkv_t = raw["w_qkv"].T                                 # (E, 3E): columns [q | k | v]
    wq_t = w_qkv_t[:, :embed_dim]
    wk_t = w_qkv_t[:, embed_dim:2 * embed_dim]
    wv_t = w_qkv_t[:, 2 * embed_dim:]

    def heads_in(w):                                         # (E, E) -> (H, E, Dh)
        return jnp.transpose(w.reshape(embed_dim, num_heads, head_dim), (1, 0, 2))

    bq, bk, bv = jnp.split(raw["b_qkv"], 3)

    def heads_bias(b):                                       # (E,) -> (H, 1, Dh)
        return b.reshape(num_heads, 1, head_dim)

    return {
        "wq_h": heads_in(wq_t), "wk_h": heads_in(wk_t), "wv_h": heads_in(wv_t),
        "bq_h": heads_bias(bq), "bk_h": heads_bias(bk), "bv_h": heads_bias(bv),
        "wo_h": raw["w_o"].T.reshape(num_heads, head_dim, embed_dim),   # (H, Dh, E)
        "b_o": raw["b_o"].reshape(1, -1),
        "ln1_g": raw["ln1_g"].reshape(1, -1),
        "ln1_b": raw["ln1_b"].reshape(1, -1),
        "w1_t": raw["w1"].T,
        "b1": raw["b1"].reshape(1, -1),
        "w2_t": raw["w2"].T,
        "b2": raw["b2"].reshape(1, -1),
        "ln2_g": raw["ln2_g"].reshape(1, -1),
        "ln2_b": raw["ln2_b"].reshape(1, -1),
    }


# --------------------------------------------------------------------------------------
# Pure-JAX reference (eval-mode PyTorch forward)
# --------------------------------------------------------------------------------------
def reference_forward(x, raw, num_heads):
    batch, seq, embed_dim = x.shape
    head_dim = embed_dim // num_heads

    def layer_norm(z, g, b):
        mean = jnp.mean(z, axis=-1, keepdims=True)
        var = jnp.mean((z - mean) ** 2, axis=-1, keepdims=True)
        return (z - mean) / jnp.sqrt(var + LN_EPS) * g + b

    qkv = x @ raw["w_qkv"].T + raw["b_qkv"]
    q, k, v = jnp.split(qkv, 3, axis=-1)

    def split_heads(t):
        return t.reshape(batch, seq, num_heads, head_dim).transpose(0, 2, 1, 3)

    q, k, v = split_heads(q), split_heads(k), split_heads(v)
    s = jnp.einsum("bhqd,bhkd->bhqk", q, k) / math.sqrt(head_dim)
    p = jax.nn.softmax(s, axis=-1)
    ctx = jnp.einsum("bhqk,bhkd->bhqd", p, v)
    ctx = ctx.transpose(0, 2, 1, 3).reshape(batch, seq, embed_dim)
    attn_out = ctx @ raw["w_o"].T + raw["b_o"]

    y = layer_norm(x + attn_out, raw["ln1_g"], raw["ln1_b"])
    ff = jnp.maximum(y @ raw["w1"].T + raw["b1"], 0.0) @ raw["w2"].T + raw["b2"]
    return layer_norm(y + ff, raw["ln2_g"], raw["ln2_b"])


if __name__ == "__main__":
    BATCH, SEQ, EMBED, HEADS = 2, 8, 32, 4

    key = jax.random.PRNGKey(0)
    k_x, k_p = jax.random.split(key)
    x = jax.random.normal(k_x, (BATCH, SEQ, EMBED), jnp.float32)
    raw = init_params(k_p, EMBED)
    prepared = prepare_params(raw, HEADS)      # one-time head-major weight layout prep

    out = transformer_encoder_block(x, prepared, HEADS)
    jax.block_until_ready(out)

    with jax.default_matmul_precision("highest"):
        ref = reference_forward(x, raw, HEADS)
    assert out.shape == (BATCH, SEQ, EMBED)
    max_err = jnp.max(jnp.abs(out - ref))
    assert jnp.allclose(out, ref, atol=1e-2, rtol=1e-2), f"max_abs_err={max_err}"

    print("KERNEL_OK")
</pallas_src>

<mosaic_0001>
module attributes {stable_mosaic.version = 11 : i64} {
  func.func @_attn_ln_kernel(%arg0: i32, %arg1: memref<1x8x32xf32, #tpu.memory_space<vmem>>, %arg2: memref<4x32x8xf32, #tpu.memory_space<vmem>>, %arg3: memref<4x32x8xf32, #tpu.memory_space<vmem>>, %arg4: memref<4x32x8xf32, #tpu.memory_space<vmem>>, %arg5: memref<4x1x8xf32, #tpu.memory_space<vmem>>, %arg6: memref<4x1x8xf32, #tpu.memory_space<vmem>>, %arg7: memref<4x1x8xf32, #tpu.memory_space<vmem>>, %arg8: memref<4x8x32xf32, #tpu.memory_space<vmem>>, %arg9: memref<1x32xf32, #tpu.memory_space<vmem>>, %arg10: memref<1x32xf32, #tpu.memory_space<vmem>>, %arg11: memref<1x32xf32, #tpu.memory_space<vmem>>, %arg12: memref<1x8x32xf32, #tpu.memory_space<vmem>>) attributes {dimension_semantics = [#tpu.dimension_semantics<parallel>], iteration_bounds = array<i64: 2>, scalar_prefetch = 0 : i64, scratch_operands = 0 : i64, tpu.core_type = #tpu.core_type<tc>, window_params = [{transform_indices = @transform_0, window_bounds = array<i64: 1, 8, 32>}, {pipeline_mode = #tpu.pipeline_mode<synchronous>, transform_indices = @transform_1, window_bounds = array<i64: 4, 32, 8>}, {pipeline_mode = #tpu.pipeline_mode<synchronous>, transform_indices = @transform_2, window_bounds = array<i64: 4, 32, 8>}, {pipeline_mode = #tpu.pipeline_mode<synchronous>, transform_indices = @transform_3, window_bounds = array<i64: 4, 32, 8>}, {pipeline_mode = #tpu.pipeline_mode<synchronous>, transform_indices = @transform_4, window_bounds = array<i64: 4, 1, 8>}, {pipeline_mode = #tpu.pipeline_mode<synchronous>, transform_indices = @transform_5, window_bounds = array<i64: 4, 1, 8>}, {pipeline_mode = #tpu.pipeline_mode<synchronous>, transform_indices = @transform_6, window_bounds = array<i64: 4, 1, 8>}, {pipeline_mode = #tpu.pipeline_mode<synchronous>, transform_indices = @transform_7, window_bounds = array<i64: 4, 8, 32>}, {pipeline_mode = #tpu.pipeline_mode<synchronous>, transform_indices = @transform_8, window_bounds = array<i64: 1, 32>}, {pipeline_mode = #tpu.pipeline_mode<synchronous>, transform_indices = @transform_9, window_bounds = array<i64: 1, 32>}, {pipeline_mode = #tpu.pipeline_mode<synchronous>, transform_indices = @transform_10, window_bounds = array<i64: 1, 32>}, {transform_indices = @transform_11, window_bounds = array<i64: 1, 8, 32>}]} {
    %c0 = arith.constant 0 : index
    %c0_0 = arith.constant 0 : index
    %c0_1 = arith.constant 0 : index
    %0 = vector.load %arg1[%c0, %c0_0, %c0_1] : memref<1x8x32xf32, #tpu.memory_space<vmem>>, vector<1x8x32xf32>
    %1 = vector.shape_cast %0 : vector<1x8x32xf32> to vector<8x32xf32>
    %c0_2 = arith.constant 0 : index
    %c0_3 = arith.constant 0 : index
    %c0_4 = arith.constant 0 : index
    %2 = vector.load %arg2[%c0_2, %c0_3, %c0_4] : memref<4x32x8xf32, #tpu.memory_space<vmem>>, vector<1x32x8xf32>
    %3 = vector.shape_cast %2 : vector<1x32x8xf32> to vector<32x8xf32>
    %cst = arith.constant dense<0.000000e+00> : vector<8x8xf32>
    %4 = tpu.matmul %1, %3, %cst {dimension_numbers = #tpu.dot_dimension_numbers<[1], [0], [0], [1], [0, 0, 1, 1], [], []>} : vector<8x32xf32>, vector<32x8xf32>, vector<8x8xf32> -> vector<8x8xf32>
    %c0_5 = arith.constant 0 : index
    %c0_6 = arith.constant 0 : index
    %c0_7 = arith.constant 0 : index
    %5 = vector.load %arg3[%c0_5, %c0_6, %c0_7] : memref<4x32x8xf32, #tpu.memory_space<vmem>>, vector<1x32x8xf32>
    %6 = vector.shape_cast %5 : vector<1x32x8xf32> to vector<32x8xf32>
    %cst_8 = arith.constant dense<0.000000e+00> : vector<8x8xf32>
    %7 = tpu.matmul %1, %6, %cst_8 {dimension_numbers = #tpu.dot_dimension_numbers<[1], [0], [0], [1], [0, 0, 1, 1], [], []>} : vector<8x32xf32>, vector<32x8xf32>, vector<8x8xf32> -> vector<8x8xf32>
    %c0_9 = arith.constant 0 : index
    %c0_10 = arith.constant 0 : index
    %c0_11 = arith.constant 0 : index
    %8 = vector.load %arg4[%c0_9, %c0_10, %c0_11] : memref<4x32x8xf32, #tpu.memory_space<vmem>>, vector<1x32x8xf32>
    %9 = vector.shape_cast %8 : vector<1x32x8xf32> to vector<32x8xf32>
    %cst_12 = arith.constant dense<0.000000e+00> : vector<8x8xf32>
    %10 = tpu.matmul %1, %9, %cst_12 {dimension_numbers = #tpu.dot_dimension_numbers<[1], [0], [0], [1], [0, 0, 1, 1], [], []>} : vector<8x32xf32>, vector<32x8xf32>, vector<8x8xf32> -> vector<8x8xf32>
    %c1 = arith.constant 1 : index
    %c0_13 = arith.constant 0 : index
    %c0_14 = arith.constant 0 : index
    %11 = vector.load %arg2[%c1, %c0_13, %c0_14] : memref<4x32x8xf32, #tpu.memory_space<vmem>>, vector<1x32x8xf32>
    %12 = vector.shape_cast %11 : vector<1x32x8xf32> to vector<32x8xf32>
    %cst_15 = arith.constant dense<0.000000e+00> : vector<8x8xf32>
    %13 = tpu.matmul %1, %12, %cst_15 {dimension_numbers = #tpu.dot_dimension_numbers<[1], [0], [0], [1], [0, 0, 1, 1], [], []>} : vector<8x32xf32>, vector<32x8xf32>, vector<8x8xf32> -> vector<8x8xf32>
    %c1_16 = arith.constant 1 : index
    %c0_17 = arith.constant 0 : index
    %c0_18 = arith.constant 0 : index
    %14 = vector.load %arg3[%c1_16, %c0_17, %c0_18] : memref<4x32x8xf32, #tpu.memory_space<vmem>>, vector<1x32x8xf32>
    %15 = vector.shape_cast %14 : vector<1x32x8xf32> to vector<32x8xf32>
    %cst_19 = arith.constant dense<0.000000e+00> : vector<8x8xf32>
    %16 = tpu.matmul %1, %15, %cst_19 {dimension_numbers = #tpu.dot_dimension_numbers<[1], [0], [0], [1], [0, 0, 1, 1], [], []>} : vector<8x32xf32>, vector<32x8xf32>, vector<8x8xf32> -> vector<8x8xf32>
    %c1_20 = arith.constant 1 : index
    %c0_21 = arith.constant 0 : index
    %c0_22 = arith.constant 0 : index
    %17 = vector.load %arg4[%c1_20, %c0_21, %c0_22] : memref<4x32x8xf32, #tpu.memory_space<vmem>>, vector<1x32x8xf32>
    %18 = vector.shape_cast %17 : vector<1x32x8xf32> to vector<32x8xf32>
    %cst_23 = arith.constant dense<0.000000e+00> : vector<8x8xf32>
    %19 = tpu.matmul %1, %18, %cst_23 {dimension_numbers = #tpu.dot_dimension_numbers<[1], [0], [0], [1], [0, 0, 1, 1], [], []>} : vector<8x32xf32>, vector<32x8xf32>, vector<8x8xf32> -> vector<8x8xf32>
    %c2 = arith.constant 2 : index
    %c0_24 = arith.constant 0 : index
    %c0_25 = arith.constant 0 : index
    %20 = vector.load %arg2[%c2, %c0_24, %c0_25] : memref<4x32x8xf32, #tpu.memory_space<vmem>>, vector<1x32x8xf32>
    %21 = vector.shape_cast %20 : vector<1x32x8xf32> to vector<32x8xf32>
    %cst_26 = arith.constant dense<0.000000e+00> : vector<8x8xf32>
    %22 = tpu.matmul %1, %21, %cst_26 {dimension_numbers = #tpu.dot_dimension_numbers<[1], [0], [0], [1], [0, 0, 1, 1], [], []>} : vector<8x32xf32>, vector<32x8xf32>, vector<8x8xf32> -> vector<8x8xf32>
    %c2_27 = arith.constant 2 : index
    %c0_28 = arith.constant 0 : index
    %c0_29 = arith.constant 0 : index
    %23 = vector.load %arg3[%c2_27, %c0_28, %c0_29] : memref<4x32x8xf32, #tpu.memory_space<vmem>>, vector<1x32x8xf32>
    %24 = vector.shape_cast %23 : vector<1x32x8xf32> to vector<32x8xf32>
    %cst_30 = arith.constant dense<0.000000e+00> : vector<8x8xf32>
    %25 = tpu.matmul %1, %24, %cst_30 {dimension_numbers = #tpu.dot_dimension_numbers<[1], [0], [0], [1], [0, 0, 1, 1], [], []>} : vector<8x32xf32>, vector<32x8xf32>, vector<8x8xf32> -> vector<8x8xf32>
    %c2_31 = arith.constant 2 : index
    %c0_32 = arith.constant 0 : index
    %c0_33 = arith.constant 0 : index
    %26 = vector.load %arg4[%c2_31, %c0_32, %c0_33] : memref<4x32x8xf32, #tpu.memory_space<vmem>>, vector<1x32x8xf32>
    %27 = vector.shape_cast %26 : vector<1x32x8xf32> to vector<32x8xf32>
    %cst_34 = arith.constant dense<0.000000e+00> : vector<8x8xf32>
    %28 = tpu.matmul %1, %27, %cst_34 {dimension_numbers = #tpu.dot_dimension_numbers<[1], [0], [0], [1], [0, 0, 1, 1], [], []>} : vector<8x32xf32>, vector<32x8xf32>, vector<8x8xf32> -> vector<8x8xf32>
    %c3 = arith.constant 3 : index
    %c0_35 = arith.constant 0 : index
    %c0_36 = arith.constant 0 : index
    %29 = vector.load %arg2[%c3, %c0_35, %c0_36] : memref<4x32x8xf32, #tpu.memory_space<vmem>>, vector<1x32x8xf32>
    %30 = vector.shape_cast %29 : vector<1x32x8xf32> to vector<32x8xf32>
    %cst_37 = arith.constant dense<0.000000e+00> : vector<8x8xf32>
    %31 = tpu.matmul %1, %30, %cst_37 {dimension_numbers = #tpu.dot_dimension_numbers<[1], [0], [0], [1], [0, 0, 1, 1], [], []>} : vector<8x32xf32>, vector<32x8xf32>, vector<8x8xf32> -> vector<8x8xf32>
    %c3_38 = arith.constant 3 : index
    %c0_39 = arith.constant 0 : index
    %c0_40 = arith.constant 0 : index
    %32 = vector.load %arg3[%c3_38, %c0_39, %c0_40] : memref<4x32x8xf32, #tpu.memory_space<vmem>>, vector<1x32x8xf32>
    %33 = vector.shape_cast %32 : vector<1x32x8xf32> to vector<32x8xf32>
    %cst_41 = arith.constant dense<0.000000e+00> : vector<8x8xf32>
    %34 = tpu.matmul %1, %33, %cst_41 {dimension_numbers = #tpu.dot_dimension_numbers<[1], [0], [0], [1], [0, 0, 1, 1], [], []>} : vector<8x32xf32>, vector<32x8xf32>, vector<8x8xf32> -> vector<8x8xf32>
    %c3_42 = arith.constant 3 : index
    %c0_43 = arith.constant 0 : index
    %c0_44 = arith.constant 0 : index
    %35 = vector.load %arg4[%c3_42, %c0_43, %c0_44] : memref<4x32x8xf32, #tpu.memory_space<vmem>>, vector<1x32x8xf32>
    %36 = vector.shape_cast %35 : vector<1x32x8xf32> to vector<32x8xf32>
    %cst_45 = arith.constant dense<0.000000e+00> : vector<8x8xf32>
    %37 = tpu.matmul %1, %36, %cst_45 {dimension_numbers = #tpu.dot_dimension_numbers<[1], [0], [0], [1], [0, 0, 1, 1], [], []>} : vector<8x32xf32>, vector<32x8xf32>, vector<8x8xf32> -> vector<8x8xf32>
    %38 = vector.shape_cast %4 : vector<8x8xf32> to vector<1x8x8xf32>
    %39 = vector.shape_cast %13 : vector<8x8xf32> to vector<1x8x8xf32>
    %40 = vector.shape_cast %22 : vector<8x8xf32> to vector<1x8x8xf32>
    %41 = vector.shape_cast %31 : vector<8x8xf32> to vector<1x8x8xf32>
    %42 = tpu.concatenate %38, %39, %40, %41 in 0 : vector<1x8x8xf32>, vector<1x8x8xf32>, vector<1x8x8xf32>, vector<1x8x8xf32> -> vector<4x8x8xf32>
    %c0_46 = arith.constant 0 : index
    %c0_47 = arith.constant 0 : index
    %c0_48 = arith.constant 0 : index
    %43 = vector.load %arg5[%c0_46, %c0_47, %c0_48] : memref<4x1x8xf32, #tpu.memory_space<vmem>>, vector<4x1x8xf32>
    %44 = vector.broadcast %43 : vector<4x1x8xf32> to vector<4x8x8xf32>
    %45 = arith.addf %42, %44 : vector<4x8x8xf32>
    %46 = vector.shape_cast %7 : vector<8x8xf32> to vector<1x8x8xf32>
    %47 = vector.shape_cast %16 : vector<8x8xf32> to vector<1x8x8xf32>
    %48 = vector.shape_cast %25 : vector<8x8xf32> to vector<1x8x8xf32>
    %49 = vector.shape_cast %34 : vector<8x8xf32> to vector<1x8x8xf32>
    %50 = tpu.concatenate %46, %47, %48, %49 in 0 : vector<1x8x8xf32>, vector<1x8x8xf32>, vector<1x8x8xf32>, vector<1x8x8xf32> -> vector<4x8x8xf32>
    %c0_49 = arith.constant 0 : index
    %c0_50 = arith.constant 0 : index
    %c0_51 = arith.constant 0 : index
    %51 = vector.load %arg6[%c0_49, %c0_50, %c0_51] : memref<4x1x8xf32, #tpu.memory_space<vmem>>, vector<4x1x8xf32>
    %52 = vector.broadcast %51 : vector<4x1x8xf32> to vector<4x8x8xf32>
    %53 = arith.addf %50, %52 : vector<4x8x8xf32>
    %54 = vector.shape_cast %10 : vector<8x8xf32> to vector<1x8x8xf32>
    %55 = vector.shape_cast %19 : vector<8x8xf32> to vector<1x8x8xf32>
    %56 = vector.shape_cast %28 : vector<8x8xf32> to vector<1x8x8xf32>
    %57 = vector.shape_cast %37 : vector<8x8xf32> to vector<1x8x8xf32>
    %58 = tpu.concatenate %54, %55, %56, %57 in 0 : vector<1x8x8xf32>, vector<1x8x8xf32>, vector<1x8x8xf32>, vector<1x8x8xf32> -> vector<4x8x8xf32>
    %c0_52 = arith.constant 0 : index
    %c0_53 = arith.constant 0 : index
    %c0_54 = arith.constant 0 : index
    %59 = vector.load %arg7[%c0_52, %c0_53, %c0_54] : memref<4x1x8xf32, #tpu.memory_space<vmem>>, vector<4x1x8xf32>
    %60 = vector.broadcast %59 : vector<4x1x8xf32> to vector<4x8x8xf32>
    %61 = arith.addf %58, %60 : vector<4x8x8xf32>
    "tpu.trace_start"() <{level = 10 : i32, message = "hqd,hkd->hqk"}> : () -> ()
    %cst_55 = arith.constant dense<0.000000e+00> : vector<4x8x8xf32>
    %62 = tpu.matmul %45, %53, %cst_55 {dimension_numbers = #tpu.dot_dimension_numbers<[2], [2], [1], [1], [0, 0, 0, 1, 1, 1], [0], [0]>} : vector<4x8x8xf32>, vector<4x8x8xf32>, vector<4x8x8xf32> -> vector<4x8x8xf32>
    "tpu.trace_stop"() : () -> ()
    %cst_56 = arith.constant 0.353553385 : f32
    %63 = vector.broadcast %cst_56 : f32 to vector<4x8x8xf32>
    %64 = arith.mulf %62, %63 : vector<4x8x8xf32>
    %cst_57 = arith.constant dense<0xFF800000> : vector<4x8xf32>
    %65 = vector.multi_reduction <maximumf>, %64, %cst_57 [2] : vector<4x8x8xf32> to vector<4x8xf32>
    %66 = vector.shape_cast %65 : vector<4x8xf32> to vector<4x8x1xf32>
    %67 = vector.broadcast %66 : vector<4x8x1xf32> to vector<4x8x8xf32>
    %68 = arith.subf %64, %67 : vector<4x8x8xf32>
    %69 = math.exp %68 : vector<4x8x8xf32>
    %cst_58 = arith.constant dense<0.000000e+00> : vector<4x8xf32>
    %70 = vector.multi_reduction <add>, %69, %cst_58 [2] : vector<4x8x8xf32> to vector<4x8xf32>
    %71 = vector.shape_cast %70 : vector<4x8xf32> to vector<4x8x1xf32>
    %72 = tpu.reciprocal %71 {approx = true} : vector<4x8x1xf32> -> vector<4x8x1xf32>
    %73 = vector.broadcast %72 : vector<4x8x1xf32> to vector<4x8x8xf32>
    %74 = arith.mulf %69, %73 : vector<4x8x8xf32>
    "tpu.trace_start"() <{level = 10 : i32, message = "hqk,hkd->hqd"}> : () -> ()
    %cst_59 = arith.constant dense<0.000000e+00> : vector<4x8x8xf32>
    %75 = tpu.matmul %74, %61, %cst_59 {dimension_numbers = #tpu.dot_dimension_numbers<[2], [1], [1], [2], [0, 0, 0, 1, 1, 2], [0], [0]>} : vector<4x8x8xf32>, vector<4x8x8xf32>, vector<4x8x8xf32> -> vector<4x8x8xf32>
    "tpu.trace_stop"() : () -> ()
    %76 = vector.extract_strided_slice %75 {offsets = [0, 0, 0], sizes = [1, 8, 8], strides = [1, 1, 1]} : vector<4x8x8xf32> to vector<1x8x8xf32>
    %77 = vector.shape_cast %76 : vector<1x8x8xf32> to vector<8x8xf32>
    %c0_60 = arith.constant 0 : index
    %c0_61 = arith.constant 0 : index
    %c0_62 = arith.constant 0 : index
    %78 = vector.load %arg8[%c0_60, %c0_61, %c0_62] : memref<4x8x32xf32, #tpu.memory_space<vmem>>, vector<1x8x32xf32>
    %79 = vector.shape_cast %78 : vector<1x8x32xf32> to vector<8x32xf32>
    %cst_63 = arith.constant dense<0.000000e+00> : vector<8x32xf32>
    %80 = tpu.matmul %77, %79, %cst_63 {dimension_numbers = #tpu.dot_dimension_numbers<[1], [0], [0], [1], [0, 0, 1, 1], [], []>} : vector<8x8xf32>, vector<8x32xf32>, vector<8x32xf32> -> vector<8x32xf32>
    %81 = vector.extract_strided_slice %75 {offsets = [1, 0, 0], sizes = [1, 8, 8], strides = [1, 1, 1]} : vector<4x8x8xf32> to vector<1x8x8xf32>
    %82 = vector.shape_cast %81 : vector<1x8x8xf32> to vector<8x8xf32>
    %c1_64 = arith.constant 1 : index
    %c0_65 = arith.constant 0 : index
    %c0_66 = arith.constant 0 : index
    %83 = vector.load %arg8[%c1_64, %c0_65, %c0_66] : memref<4x8x32xf32, #tpu.memory_space<vmem>>, vector<1x8x32xf32>
    %84 = vector.shape_cast %83 : vector<1x8x32xf32> to vector<8x32xf32>
    %cst_67 = arith.constant dense<0.000000e+00> : vector<8x32xf32>
    %85 = tpu.matmul %82, %84, %cst_67 {dimension_numbers = #tpu.dot_dimension_numbers<[1], [0], [0], [1], [0, 0, 1, 1], [], []>} : vector<8x8xf32>, vector<8x32xf32>, vector<8x32xf32> -> vector<8x32xf32>
    %86 = arith.addf %80, %85 : vector<8x32xf32>
    %87 = vector.extract_strided_slice %75 {offsets = [2, 0, 0], sizes = [1, 8, 8], strides = [1, 1, 1]} : vector<4x8x8xf32> to vector<1x8x8xf32>
    %88 = vector.shape_cast %87 : vector<1x8x8xf32> to vector<8x8xf32>
    %c2_68 = arith.constant 2 : index
    %c0_69 = arith.constant 0 : index
    %c0_70 = arith.constant 0 : index
    %89 = vector.load %arg8[%c2_68, %c0_69, %c0_70] : memref<4x8x32xf32, #tpu.memory_space<vmem>>, vector<1x8x32xf32>
    %90 = vector.shape_cast %89 : vector<1x8x32xf32> to vector<8x32xf32>
    %cst_71 = arith.constant dense<0.000000e+00> : vector<8x32xf32>
    %91 = tpu.matmul %88, %90, %cst_71 {dimension_numbers = #tpu.dot_dimension_numbers<[1], [0], [0], [1], [0, 0, 1, 1], [], []>} : vector<8x8xf32>, vector<8x32xf32>, vector<8x32xf32> -> vector<8x32xf32>
    %92 = arith.addf %86, %91 : vector<8x32xf32>
    %93 = vector.extract_strided_slice %75 {offsets = [3, 0, 0], sizes = [1, 8, 8], strides = [1, 1, 1]} : vector<4x8x8xf32> to vector<1x8x8xf32>
    %94 = vector.shape_cast %93 : vector<1x8x8xf32> to vector<8x8xf32>
    %c3_72 = arith.constant 3 : index
    %c0_73 = arith.constant 0 : index
    %c0_74 = arith.constant 0 : index
    %95 = vector.load %arg8[%c3_72, %c0_73, %c0_74] : memref<4x8x32xf32, #tpu.memory_space<vmem>>, vector<1x8x32xf32>
    %96 = vector.shape_cast %95 : vector<1x8x32xf32> to vector<8x32xf32>
    %cst_75 = arith.constant dense<0.000000e+00> : vector<8x32xf32>
    %97 = tpu.matmul %94, %96, %cst_75 {dimension_numbers = #tpu.dot_dimension_numbers<[1], [0], [0], [1], [0, 0, 1, 1], [], []>} : vector<8x8xf32>, vector<8x32xf32>, vector<8x32xf32> -> vector<8x32xf32>
    %98 = arith.addf %92, %97 : vector<8x32xf32>
    %c0_76 = arith.constant 0 : index
    %c0_77 = arith.constant 0 : index
    %99 = vector.load %arg9[%c0_76, %c0_77] : memref<1x32xf32, #tpu.memory_space<vmem>>, vector<1x32xf32>
    %100 = vector.broadcast %99 : vector<1x32xf32> to vector<8x32xf32>
    %101 = arith.addf %98, %100 : vector<8x32xf32>
    %102 = arith.addf %1, %101 : vector<8x32xf32>
    %cst_78 = arith.constant dense<0.000000e+00> : vector<8xf32>
    %103 = vector.multi_reduction <add>, %102, %cst_78 [1] : vector<8x32xf32> to vector<8xf32>
    %104 = vector.shape_cast %103 : vector<8xf32> to vector<8x1xf32>
    %cst_79 = arith.constant 3.200000e+01 : f32
    %105 = vector.broadcast %cst_79 : f32 to vector<8x1xf32>
    %106 = arith.divf %104, %105 : vector<8x1xf32>
    %107 = arith.mulf %102, %102 : vector<8x32xf32>
    %cst_80 = arith.constant dense<0.000000e+00> : vector<8xf32>
    %108 = vector.multi_reduction <add>, %107, %cst_80 [1] : vector<8x32xf32> to vector<8xf32>
    %109 = vector.shape_cast %108 : vector<8xf32> to vector<8x1xf32>
    %cst_81 = arith.constant 3.200000e+01 : f32
    %110 = vector.broadcast %cst_81 : f32 to vector<8x1xf32>
    %111 = arith.divf %109, %110 : vector<8x1xf32>
    %112 = arith.mulf %106, %106 : vector<8x1xf32>
    %113 = arith.subf %111, %112 : vector<8x1xf32>
    %cst_82 = arith.constant 0.000000e+00 : f32
    %114 = vector.broadcast %cst_82 : f32 to vector<8x1xf32>
    %115 = arith.maximumf %113, %114 : vector<8x1xf32>
    %116 = vector.broadcast %106 : vector<8x1xf32> to vector<8x32xf32>
    %117 = arith.subf %102, %116 : vector<8x32xf32>
    %cst_83 = arith.constant 9.99999974E-6 : f32
    %118 = vector.broadcast %cst_83 : f32 to vector<8x1xf32>
    %119 = arith.addf %115, %118 : vector<8x1xf32>
    %120 = math.rsqrt %119 : vector<8x1xf32>
    %121 = vector.broadcast %120 : vector<8x1xf32> to vector<8x32xf32>
    %122 = arith.mulf %117, %121 : vector<8x32xf32>
    %c0_84 = arith.constant 0 : index
    %c0_85 = arith.constant 0 : index
    %123 = vector.load %arg10[%c0_84, %c0_85] : memref<1x32xf32, #tpu.memory_space<vmem>>, vector<1x32xf32>
    %124 = vector.broadcast %123 : vector<1x32xf32> to vector<8x32xf32>
    %125 = arith.mulf %122, %124 : vector<8x32xf32>
    %c0_86 = arith.constant 0 : index
    %c0_87 = arith.constant 0 : index
    %126 = vector.load %arg11[%c0_86, %c0_87] : memref<1x32xf32, #tpu.memory_space<vmem>>, vector<1x32xf32>
    %127 = vector.broadcast %126 : vector<1x32xf32> to vector<8x32xf32>
    %128 = arith.addf %125, %127 : vector<8x32xf32>
    %c0_88 = arith.constant 0 : index
    %c0_89 = arith.constant 0 : index
    %c0_90 = arith.constant 0 : index
    %129 = vector.load %arg12[%c0_88, %c0_89, %c0_90] : memref<1x8x32xf32, #tpu.memory_space<vmem>>, vector<1x8x32xf32>
    %130 = vector.shape_cast %129 : vector<1x8x32xf32> to vector<8x32xf32>
    %131 = vector.shape_cast %128 : vector<8x32xf32> to vector<1x8x32xf32>
    tpu.vector_store %arg12[%c0_88, %c0_89, %c0_90], %131 {strides = array<i32>} : memref<1x8x32xf32, #tpu.memory_space<vmem>>, vector<1x8x32xf32>,
    return
  }
  func.func @transform_0(%arg0: i32) -> (i32, i32, i32) {
    %c0_i32 = arith.constant 0 : i32
    %c0_i32_0 = arith.constant 0 : i32
    %c0_i32_1 = arith.constant 0 : i32
    return %arg0, %c0_i32, %c0_i32_0 : i32, i32, i32
  }
  func.func @transform_1(%arg0: i32) -> (i32, i32, i32) {
    %c0_i32 = arith.constant 0 : i32
    %c0_i32_0 = arith.constant 0 : i32
    %c0_i32_1 = arith.constant 0 : i32
    %c0_i32_2 = arith.constant 0 : i32
    return %c0_i32, %c0_i32_0, %c0_i32_1 : i32, i32, i32
  }
  func.func @transform_2(%arg0: i32) -> (i32, i32, i32) {
    %c0_i32 = arith.constant 0 : i32
    %c0_i32_0 = arith.constant 0 : i32
    %c0_i32_1 = arith.constant 0 : i32
    %c0_i32_2 = arith.constant 0 : i32
    return %c0_i32, %c0_i32_0, %c0_i32_1 : i32, i32, i32
  }
  func.func @transform_3(%arg0: i32) -> (i32, i32, i32) {
    %c0_i32 = arith.constant 0 : i32
    %c0_i32_0 = arith.constant 0 : i32
    %c0_i32_1 = arith.constant 0 : i32
    %c0_i32_2 = arith.constant 0 : i32
    return %c0_i32, %c0_i32_0, %c0_i32_1 : i32, i32, i32
  }
  func.func @transform_4(%arg0: i32) -> (i32, i32, i32) {
    %c0_i32 = arith.constant 0 : i32
    %c0_i32_0 = arith.constant 0 : i32
    %c0_i32_1 = arith.constant 0 : i32
    %c0_i32_2 = arith.constant 0 : i32
    return %c0_i32, %c0_i32_0, %c0_i32_1 : i32, i32, i32
  }
  func.func @transform_5(%arg0: i32) -> (i32, i32, i32) {
    %c0_i32 = arith.constant 0 : i32
    %c0_i32_0 = arith.constant 0 : i32
    %c0_i32_1 = arith.constant 0 : i32
    %c0_i32_2 = arith.constant 0 : i32
    return %c0_i32, %c0_i32_0, %c0_i32_1 : i32, i32, i32
  }
  func.func @transform_6(%arg0: i32) -> (i32, i32, i32) {
    %c0_i32 = arith.constant 0 : i32
    %c0_i32_0 = arith.constant 0 : i32
    %c0_i32_1 = arith.constant 0 : i32
    %c0_i32_2 = arith.constant 0 : i32
    return %c0_i32, %c0_i32_0, %c0_i32_1 : i32, i32, i32
  }
  func.func @transform_7(%arg0: i32) -> (i32, i32, i32) {
    %c0_i32 = arith.constant 0 : i32
    %c0_i32_0 = arith.constant 0 : i32
    %c0_i32_1 = arith.constant 0 : i32
    %c0_i32_2 = arith.constant 0 : i32
    return %c0_i32, %c0_i32_0, %c0_i32_1 : i32, i32, i32
  }
  func.func @transform_8(%arg0: i32) -> (i32, i32) {
    %c0_i32 = arith.constant 0 : i32
    %c0_i32_0 = arith.constant 0 : i32
    %c0_i32_1 = arith.constant 0 : i32
    return %c0_i32, %c0_i32_0 : i32, i32
  }
  func.func @transform_9(%arg0: i32) -> (i32, i32) {
    %c0_i32 = arith.constant 0 : i32
    %c0_i32_0 = arith.constant 0 : i32
    %c0_i32_1 = arith.constant 0 : i32
    return %c0_i32, %c0_i32_0 : i32, i32
  }
  func.func @transform_10(%arg0: i32) -> (i32, i32) {
    %c0_i32 = arith.constant 0 : i32
    %c0_i32_0 = arith.constant 0 : i32
    %c0_i32_1 = arith.constant 0 : i32
    return %c0_i32, %c0_i32_0 : i32, i32
  }
  func.func @transform_11(%arg0: i32) -> (i32, i32, i32) {
    %c0_i32 = arith.constant 0 : i32
    %c0_i32_0 = arith.constant 0 : i32
    %c0_i32_1 = arith.constant 0 : i32
    return %arg0, %c0_i32, %c0_i32_0 : i32, i32, i32
  }
}

</mosaic_0001>

<llo_original>
// kernel: tpu_custom_call.1
$region0: #{tpu_custom_call.1}
  #allocation0 [shape = 'u32[]', space=smem, size = 0x4, offset = 0x4, fixed_abs, tag = 'smem constant byte address 0x4 - core index']
  #allocation1 [shape = 'u32[72,128]{1,0:T(1,128)}', space=vmem, size = 0x9000, scoped, tag = 'internal scratch']
  %s0 = inlined_call_operand.vmem [shape: f32[2,8,32], index: 0, kind: input, shape index: {}]
  %s1 = inlined_call_operand.vmem [shape: f32[4,32,8], index: 1, kind: input, shape index: {}]
  %s2 = inlined_call_operand.vmem [shape: f32[4,32,8], index: 2, kind: input, shape index: {}]
  %s3 = inlined_call_operand.vmem [shape: f32[4,32,8], index: 3, kind: input, shape index: {}]
  %s4 = inlined_call_operand.vmem [shape: f32[4,1,8], index: 4, kind: input, shape index: {}]
  %s5 = inlined_call_operand.vmem [shape: f32[4,1,8], index: 5, kind: input, shape index: {}]
  %s6 = inlined_call_operand.vmem [shape: f32[4,1,8], index: 6, kind: input, shape index: {}]
  %s7 = inlined_call_operand.vmem [shape: f32[4,8,32], index: 7, kind: input, shape index: {}]
  %s8 = inlined_call_operand.vmem [shape: f32[1,32], index: 8, kind: input, shape index: {}]
  %s9 = inlined_call_operand.vmem [shape: f32[1,32], index: 9, kind: input, shape index: {}]
  %s10 = inlined_call_operand.vmem [shape: f32[1,32], index: 10, kind: input, shape index: {}]
  %s11 = inlined_call_operand.hbm [shape: f32[2,8,32], index: 11, kind: output, shape index: {}]
  %s12 = sld [smem:[#allocation0]]
  $region77: #{tpu_custom_call.1} parent=0
    _
  %s14 = ssub.s32 1, %s12
  %s15 = scalar_select 0, %s14, %s12
  $region1: #{tpu_custom_call.1} parent=0
    #allocation2 [shape = 'u8[8192]{0}', space=vmem, size = 0x2000, scoped, tag = 'output window, operand 0']
    #allocation3 [shape = 's32[2]{0}', space=sflag, size = 0x8, scoped, tag = 'scoped memory for tpu_custom_call.1']
    %16 = vsyncpa [#allocation3], 0
    %s17 = scalar_lea.sflag [#allocation3], 1
    %18 = vsyncpa %s17, 0
    loop: start=0, step=1, limit=4
    $region2: #{tpu_custom_call.1} parent=1 // loop_pre_header
      _
    $region3: #{tpu_custom_call.1} parent=1 // loop_header
      %s20 = sphi 0, %s24
      %p21 = scmp.ge.s32.totalorder %s20, 4
      %s30 = sphi 0, %s32
      %s33 = sphi 0, %s30
      %s34 = sphi 0, %s33
      %s50 = sphi 0, %s34
      %s54 = sphi 0, %s54
      %s56 = sphi 0, %s54
      %s57 = sphi 0, %s56
      %s71 = sphi 0, %s57
      %s75 = sphi 0, %s75
      %s77 = sphi 0, %s75
      %s78 = sphi 0, %s77
      %s92 = sphi 0, %s78
      %s96 = sphi 0, %s96
      %s98 = sphi 0, %s96
      %s99 = sphi 0, %s98
      %s113 = sphi 0, %s99
      %s117 = sphi 0, %s117
      %s119 = sphi 0, %s117
      %s120 = sphi 0, %s119
      %s134 = sphi 0, %s120
      %s138 = sphi 0, %s138
      %s140 = sphi 0, %s138
      %s141 = sphi 0, %s140
      %s155 = sphi 0, %s141
      %s159 = sphi 0, %s159
      %s161 = sphi 0, %s159
      %s162 = sphi 0, %s161
      %s176 = sphi 0, %s162
      %s180 = sphi 0, %s180
      %s182 = sphi 0, %s180
      %s183 = sphi 0, %s182
      %s197 = sphi 0, %s183
      %s201 = sphi 0, %s201
      %s203 = sphi 0, %s201
      %s204 = sphi 0, %s203
      %s218 = sphi 0, %s204
      %s222 = sphi 0, %s222
      %s224 = sphi 0, %s222
      %s225 = sphi 0, %s224
      %s239 = sphi 0, %s225
      %s243 = sphi 0, %s243
      %s245 = sphi 0, %s243
      %s246 = sphi 0, %s245
      %s260 = sphi 0, %s246
      %s266 = sphi 0, %s268
      %s269 = sphi 0, %s266
      %s270 = sphi 0, %s269
      %s286 = sphi 0, %s270
    $region4: #{tpu_custom_call.1} parent=1 // loop_header_branch
      %23 = sbr.rel (%p21) target = $region8
    $region5: #{tpu_custom_call.1} parent=1 // loop_body
      %s25 = ssub.s32 %s20, 1
      %s26 = ssub.s32 %s20, 2
      %s27 = sadd.s32 %s20, 1
      %s28 = ssub.s32 %s20, %s27
      %p29 = scmp.eq.s32.totalorder %s28, 0
      %s31 = sadd.s32 %s30, 1
      %s32 = scalar_select %p29, %s30, %s31
      %p35 = pneg %p29
      %p36 = scmp.eq.s32.totalorder %s20, 1
      %p37 = por %p35, %p36
      %p38 = scmp.ne.s32.totalorder %s30, %s33
      %p39 = scmp.eq.s32.totalorder %s20, 0
      %p40 = por %p38, %p39
      %p41 = scmp.ne.s32.totalorder %s30, %s33
      %p42 = scmp.eq.s32.totalorder %s25, 1
      %p43 = por %p41, %p42
      %p44 = scmp.ne.s32.totalorder %s33, %s34
      %p45 = scmp.eq.s32.totalorder %s25, 0
      %p46 = por %p44, %p45
      %p47 = scmp.ne.s32.totalorder %s33, %s34
      %p48 = scmp.eq.s32.totalorder %s26, 1
      %p49 = por %p47, %p48
      %p51 = scmp.ne.s32.totalorder %s34, %s50
      %p52 = scmp.eq.s32.totalorder %s26, 0
      %p53 = por %p51, %p52
      %s55 = sadd.s32 %s54, 1
      %p58 = scmp.eq.s32.totalorder %s20, 1
      %p59 = scmp.ne.s32.totalorder %s54, %s56
      %p60 = scmp.eq.s32.totalorder %s20, 0
      %p61 = por %p59, %p60
      %p62 = scmp.ne.s32.totalorder %s54, %s56
      %p63 = scmp.eq.s32.totalorder %s25, 1
      %p64 = por %p62, %p63
      %p65 = scmp.ne.s32.totalorder %s56, %s57
      %p66 = scmp.eq.s32.totalorder %s25, 0
      %p67 = por %p65, %p66
      %p68 = scmp.ne.s32.totalorder %s56, %s57
      %p69 = scmp.eq.s32.totalorder %s26, 1
      %p70 = por %p68, %p69
      %p72 = scmp.ne.s32.totalorder %s57, %s71
      %p73 = scmp.eq.s32.totalorder %s26, 0
      %p74 = por %p72, %p73
      %s76 = sadd.s32 %s75, 1
      %p79 = scmp.eq.s32.totalorder %s20, 1
      %p80 = scmp.ne.s32.totalorder %s75, %s77
      %p81 = scmp.eq.s32.totalorder %s20, 0
      %p82 = por %p80, %p81
      %p83 = scmp.ne.s32.totalorder %s75, %s77
      %p84 = scmp.eq.s32.totalorder %s25, 1
      %p85 = por %p83, %p84
      %p86 = scmp.ne.s32.totalorder %s77, %s78
      %p87 = scmp.eq.s32.totalorder %s25, 0
      %p88 = por %p86, %p87
      %p89 = scmp.ne.s32.totalorder %s77, %s78
      %p90 = scmp.eq.s32.totalorder %s26, 1
      %p91 = por %p89, %p90
      %p93 = scmp.ne.s32.totalorder %s78, %s92
      %p94 = scmp.eq.s32.totalorder %s26, 0
      %p95 = por %p93, %p94
      %s97 = sadd.s32 %s96, 1
      %p100 = scmp.eq.s32.totalorder %s20, 1
      %p101 = scmp.ne.s32.totalorder %s96, %s98
      %p102 = scmp.eq.s32.totalorder %s20, 0
      %p103 = por %p101, %p102
      %p104 = scmp.ne.s32.totalorder %s96, %s98
      %p105 = scmp.eq.s32.totalorder %s25, 1
      %p106 = por %p104, %p105
      %p107 = scmp.ne.s32.totalorder %s98, %s99
      %p108 = scmp.eq.s32.totalorder %s25, 0
      %p109 = por %p107, %p108
      %p110 = scmp.ne.s32.totalorder %s98, %s99
      %p111 = scmp.eq.s32.totalorder %s26, 1
      %p112 = por %p110, %p111
      %p114 = scmp.ne.s32.totalorder %s99, %s113
      %p115 = scmp.eq.s32.totalorder %s26, 0
      %p116 = por %p114, %p115
      %s118 = sadd.s32 %s117, 1
      %p121 = scmp.eq.s32.totalorder %s20, 1
      %p122 = scmp.ne.s32.totalorder %s117, %s119
      %p123 = scmp.eq.s32.totalorder %s20, 0
      %p124 = por %p122, %p123
      %p125 = scmp.ne.s32.totalorder %s117, %s119
      %p126 = scmp.eq.s32.totalorder %s25, 1
      %p127 = por %p125, %p126
      %p128 = scmp.ne.s32.totalorder %s119, %s120
      %p129 = scmp.eq.s32.totalorder %s25, 0
      %p130 = por %p128, %p129
      %p131 = scmp.ne.s32.totalorder %s119, %s120
      %p132 = scmp.eq.s32.totalorder %s26, 1
      %p133 = por %p131, %p132
      %p135 = scmp.ne.s32.totalorder %s120, %s134
      %p136 = scmp.eq.s32.totalorder %s26, 0
      %p137 = por %p135, %p136
      %s139 = sadd.s32 %s138, 1
      %p142 = scmp.eq.s32.totalorder %s20, 1
      %p143 = scmp.ne.s32.totalorder %s138, %s140
      %p144 = scmp.eq.s32.totalorder %s20, 0
      %p145 = por %p143, %p144
      %p146 = scmp.ne.s32.totalorder %s138, %s140
      %p147 = scmp.eq.s32.totalorder %s25, 1
      %p148 = por %p146, %p147
      %p149 = scmp.ne.s32.totalorder %s140, %s141
      %p150 = scmp.eq.s32.totalorder %s25, 0
      %p151 = por %p149, %p150
      %p152 = scmp.ne.s32.totalorder %s140, %s141
      %p153 = scmp.eq.s32.totalorder %s26, 1
      %p154 = por %p152, %p153
      %p156 = scmp.ne.s32.totalorder %s141, %s155
      %p157 = scmp.eq.s32.totalorder %s26, 0
      %p158 = por %p156, %p157
      %s160 = sadd.s32 %s159, 1
      %p163 = scmp.eq.s32.totalorder %s20, 1
      %p164 = scmp.ne.s32.totalorder %s159, %s161
      %p165 = scmp.eq.s32.totalorder %s20, 0
      %p166 = por %p164, %p165
      %p167 = scmp.ne.s32.totalorder %s159, %s161
      %p168 = scmp.eq.s32.totalorder %s25, 1
      %p169 = por %p167, %p168
      %p170 = scmp.ne.s32.totalorder %s161, %s162
      %p171 = scmp.eq.s32.totalorder %s25, 0
      %p172 = por %p170, %p171
      %p173 = scmp.ne.s32.totalorder %s161, %s162
      %p174 = scmp.eq.s32.totalorder %s26, 1
      %p175 = por %p173, %p174
      %p177 = scmp.ne.s32.totalorder %s162, %s176
      %p178 = scmp.eq.s32.totalorder %s26, 0
      %p179 = por %p177, %p178
      %s181 = sadd.s32 %s180, 1
      %p184 = scmp.eq.s32.totalorder %s20, 1
      %p185 = scmp.ne.s32.totalorder %s180, %s182
      %p186 = scmp.eq.s32.totalorder %s20, 0
      %p187 = por %p185, %p186
      %p188 = scmp.ne.s32.totalorder %s180, %s182
      %p189 = scmp.eq.s32.totalorder %s25, 1
      %p190 = por %p188, %p189
      %p191 = scmp.ne.s32.totalorder %s182, %s183
      %p192 = scmp.eq.s32.totalorder %s25, 0
      %p193 = por %p191, %p192
      %p194 = scmp.ne.s32.totalorder %s182, %s183
      %p195 = scmp.eq.s32.totalorder %s26, 1
      %p196 = por %p194, %p195
      %p198 = scmp.ne.s32.totalorder %s183, %s197
      %p199 = scmp.eq.s32.totalorder %s26, 0
      %p200 = por %p198, %p199
      %s202 = sadd.s32 %s201, 1
      %p205 = scmp.eq.s32.totalorder %s20, 1
      %p206 = scmp.ne.s32.totalorder %s201, %s203
      %p207 = scmp.eq.s32.totalorder %s20, 0
      %p208 = por %p206, %p207
      %p209 = scmp.ne.s32.totalorder %s201, %s203
      %p210 = scmp.eq.s32.totalorder %s25, 1
      %p211 = por %p209, %p210
      %p212 = scmp.ne.s32.totalorder %s203, %s204
      %p213 = scmp.eq.s32.totalorder %s25, 0
      %p214 = por %p212, %p213
      %p215 = scmp.ne.s32.totalorder %s203, %s204
      %p216 = scmp.eq.s32.totalorder %s26, 1
      %p217 = por %p215, %p216
      %p219 = scmp.ne.s32.totalorder %s204, %s218
      %p220 = scmp.eq.s32.totalorder %s26, 0
      %p221 = por %p219, %p220
      %s223 = sadd.s32 %s222, 1
      %p226 = scmp.eq.s32.totalorder %s20, 1
      %p227 = scmp.ne.s32.totalorder %s222, %s224
      %p228 = scmp.eq.s32.totalorder %s20, 0
      %p229 = por %p227, %p228
      %p230 = scmp.ne.s32.totalorder %s222, %s224
      %p231 = scmp.eq.s32.totalorder %s25, 1
      %p232 = por %p230, %p231
      %p233 = scmp.ne.s32.totalorder %s224, %s225
      %p234 = scmp.eq.s32.totalorder %s25, 0
      %p235 = por %p233, %p234
      %p236 = scmp.ne.s32.totalorder %s224, %s225
      %p237 = scmp.eq.s32.totalorder %s26, 1
      %p238 = por %p236, %p237
      %p240 = scmp.ne.s32.totalorder %s225, %s239
      %p241 = scmp.eq.s32.totalorder %s26, 0
      %p242 = por %p240, %p241
      %s244 = sadd.s32 %s243, 1
      %p247 = scmp.eq.s32.totalorder %s20, 1
      %p248 = scmp.ne.s32.totalorder %s243, %s245
      %p249 = scmp.eq.s32.totalorder %s20, 0
      %p250 = por %p248, %p249
      %p251 = scmp.ne.s32.totalorder %s243, %s245
      %p252 = scmp.eq.s32.totalorder %s25, 1
      %p253 = por %p251, %p252
      %p254 = scmp.ne.s32.totalorder %s245, %s246
      %p255 = scmp.eq.s32.totalorder %s25, 0
      %p256 = por %p254, %p255
      %p257 = scmp.ne.s32.totalorder %s245, %s246
      %p258 = scmp.eq.s32.totalorder %s26, 1
      %p259 = por %p257, %p258
      %p261 = scmp.ne.s32.totalorder %s246, %s260
      %p262 = scmp.eq.s32.totalorder %s26, 0
      %p263 = por %p261, %p262
      %s264 = ssub.s32 %s20, %s27
      %p265 = scmp.eq.s32.totalorder %s264, 0
      %s267 = sadd.s32 %s266, 1
      %s268 = scalar_select %p265, %s266, %s267
      %p271 = pneg %p265
      %p272 = scmp.eq.s32.totalorder %s20, 1
      %p273 = por %p271, %p272
      %p274 = scmp.ne.s32.totalorder %s266, %s269
      %p275 = scmp.eq.s32.totalorder %s20, 0
      %p276 = por %p274, %p275
      %p277 = scmp.ne.s32.totalorder %s266, %s269
      %p278 = scmp.eq.s32.totalorder %s25, 1
      %p279 = por %p277, %p278
      %p280 = scmp.ne.s32.totalorder %s269, %s270
      %p281 = scmp.eq.s32.totalorder %s25, 0
      %p282 = por %p280, %p281
      %p283 = scmp.ne.s32.totalorder %s269, %s270
      %p284 = scmp.eq.s32.totalorder %s26, 1
      %p285 = por %p283, %p284
      %p287 = scmp.ne.s32.totalorder %s270, %s286
      %p288 = scmp.eq.s32.totalorder %s26, 0
      %p289 = por %p287, %p288
      %p290 = scmp.le.s32.totalorder 1, %s20
      %p291 = scmp.lt.s32.totalorder %s20, 3
      %p292 = pnand %p290, %p291
      %p293 = pneg %p292
      // Predicated region
      $region9: #{tpu_custom_call.1} parent=5 // pred_check
        _
      $region10: #{tpu_custom_call.1} parent=5 // pred_check_branch
        %295 = sbr.rel (%p292) target = $region12
      $region11: #{tpu_custom_call.1} parent=5 // pred_region
        %s296 = ssub.s32 %s20, 1
        // Predicated region
        $region13: #{tpu_custom_call.1} parent=11 // pred_check
          %p297 = pneg %p67
        $region14: #{tpu_custom_call.1} parent=11 // pred_check_branch
          %299 = sbr.rel (%p297) target = $region16
        $region15: #{tpu_custom_call.1} parent=11 // pred_region
          _
        $region16: #{tpu_custom_call.1} parent=11 // pred_fallthru
          _
        // Predicated region
        $region17: #{tpu_custom_call.1} parent=11 // pred_check
          %p300 = pneg %p88
        $region18: #{tpu_custom_call.1} parent=11 // pred_check_branch
          %302 = sbr.rel (%p300) target = $region20
        $region19: #{tpu_custom_call.1} parent=11 // pred_region
          _
        $region20: #{tpu_custom_call.1} parent=11 // pred_fallthru
          _
        // Predicated region
        $region21: #{tpu_custom_call.1} parent=11 // pred_check
          %p303 = pneg %p109
        $region22: #{tpu_custom_call.1} parent=11 // pred_check_branch
          %305 = sbr.rel (%p303) target = $region24
        $region23: #{tpu_custom_call.1} parent=11 // pred_region
          _
        $region24: #{tpu_custom_call.1} parent=11 // pred_fallthru
          _
        // Predicated region
        $region25: #{tpu_custom_call.1} parent=11 // pred_check
          %p306 = pneg %p130
        $region26: #{tpu_custom_call.1} parent=11 // pred_check_branch
          %308 = sbr.rel (%p306) target = $region28
        $region27: #{tpu_custom_call.1} parent=11 // pred_region
          _
        $region28: #{tpu_custom_call.1} parent=11 // pred_fallthru
          _
        // Predicated region
        $region29: #{tpu_custom_call.1} parent=11 // pred_check
          %p309 = pneg %p151
        $region30: #{tpu_custom_call.1} parent=11 // pred_check_branch
          %311 = sbr.rel (%p309) target = $region32
        $region31: #{tpu_custom_call.1} parent=11 // pred_region
          _
        $region32: #{tpu_custom_call.1} parent=11 // pred_fallthru
          _
        // Predicated region
        $region33: #{tpu_custom_call.1} parent=11 // pred_check
          %p312 = pneg %p172
        $region34: #{tpu_custom_call.1} parent=11 // pred_check_branch
          %314 = sbr.rel (%p312) target = $region36
        $region35: #{tpu_custom_call.1} parent=11 // pred_region
          _
        $region36: #{tpu_custom_call.1} parent=11 // pred_fallthru
          _
        // Predicated region
        $region37: #{tpu_custom_call.1} parent=11 // pred_check
          %p315 = pneg %p193
        $region38: #{tpu_custom_call.1} parent=11 // pred_check_branch
          %317 = sbr.rel (%p315) target = $region40
        $region39: #{tpu_custom_call.1} parent=11 // pred_region
          _
        $region40: #{tpu_custom_call.1} parent=11 // pred_fallthru
          _
        // Predicated region
        $region41: #{tpu_custom_call.1} parent=11 // pred_check
          %p318 = pneg %p214
        $region42: #{tpu_custom_call.1} parent=11 // pred_check_branch
          %320 = sbr.rel (%p318) target = $region44
        $region43: #{tpu_custom_call.1} parent=11 // pred_region
          _
        $region44: #{tpu_custom_call.1} parent=11 // pred_fallthru
          _
        // Predicated region
        $region45: #{tpu_custom_call.1} parent=11 // pred_check
          %p321 = pneg %p235
        $region46: #{tpu_custom_call.1} parent=11 // pred_check_branch
          %323 = sbr.rel (%p321) target = $region48
        $region47: #{tpu_custom_call.1} parent=11 // pred_region
          _
        $region48: #{tpu_custom_call.1} parent=11 // pred_fallthru
          _
        // Predicated region
        $region49: #{tpu_custom_call.1} parent=11 // pred_check
          %p324 = pneg %p256
        $region50: #{tpu_custom_call.1} parent=11 // pred_check_branch
          %326 = sbr.rel (%p324) target = $region52
        $region51: #{tpu_custom_call.1} parent=11 // pred_region
          _
        $region52: #{tpu_custom_call.1} parent=11 // pred_fallthru
          _
      $region12: #{tpu_custom_call.1} parent=5 // pred_fallthru
        _
      %p327 = scmp.lt.s32.totalorder %s20, 2
      // Predicated region
      $region53: #{tpu_custom_call.1} parent=5 // pred_check
        %p328 = pneg %p327
      $region54: #{tpu_custom_call.1} parent=5 // pred_check_branch
        %330 = sbr.rel (%p328) target = $region56
      $region55: #{tpu_custom_call.1} parent=5 // pred_region
        // Predicated region
        $region57: #{tpu_custom_call.1} parent=55 // pred_check
          %p331 = pneg %p40
        $region58: #{tpu_custom_call.1} parent=55 // pred_check_branch
          %333 = sbr.rel (%p331) target = $region60
        $region59: #{tpu_custom_call.1} parent=55 // pred_region
          %p334 = scmp.lt.s32.totalorder %s20, 1
          %s335 = scalar_select %p334, %s20, 1
          %s336 = smul.addr %s335, 8
          %s337 = scalar_lea.vmem %s0, %s336
        $region60: #{tpu_custom_call.1} parent=55 // pred_fallthru
          _
      $region56: #{tpu_custom_call.1} parent=5 // pred_fallthru
        _
      %p338 = scmp.le.s32.totalorder 1, %s20
      %p339 = scmp.lt.s32.totalorder %s20, 3
      %p340 = pnand %p338, %p339
      %p341 = pneg %p340
      // Predicated region
      $region61: #{tpu_custom_call.1} parent=5 // pred_check
        _
      $region62: #{tpu_custom_call.1} parent=5 // pred_check_branch
        %343 = sbr.rel (%p340) target = $region64
      $region63: #{tpu_custom_call.1} parent=5 // pred_region
        %s344 = ssub.s32 %s20, 1
        %p345 = scmp.lt.s32.totalorder %s25, 1
        %s346 = scalar_select %p345, %s25, 1
        %s347 = smul.addr %s346, 8
        %s348 = scalar_lea.vmem %s0, %s347
        %p349 = pneg %p46
        %p350 = pneg %p43
        %p351 = pneg %p67
        %p352 = pneg %p64
        %p353 = pneg %p88
        %p354 = pneg %p85
        %p355 = pneg %p109
        %p356 = pneg %p106
        %p357 = pneg %p130
        %p358 = pneg %p127
        %p359 = pneg %p151
        %p360 = pneg %p148
        %p361 = pneg %p172
        %p362 = pneg %p169
        %p363 = pneg %p193
        %p364 = pneg %p190
        %p365 = pneg %p214
        %p366 = pneg %p211
        %p367 = pneg %p235
        %p368 = pneg %p232
        %p369 = pneg %p256
        %p370 = pneg %p253
        %p371 = pneg %p282
        %p372 = pneg %p279
        %s373 = sand.u32 %s269, 1
        %s374 = scalar_lea.sflag [#allocation3], %s373
        %s375 = sand.u32 %s269, 1
        %s376 = smul.addr %s375, 8
        %s377 = scalar_lea.vmem [#allocation2], %s376
        %p378 = scmp.lt.s32.totalorder %s25, 1
        %s379 = scalar_select %p378, %s25, 1
        %s380 = smul.addr %s379, 8
        %s381 = scalar_lea.vmem %s0, %s380
        %v382 = vld [vmem:[%s381] sm:$0xff]
        %v383 = vld [vmem:[%s1] sm:$0xff]
        %v384 = vld [vmem:[%s1 + $0x8] sm:$0xff]
        %v385 = vld [vmem:[%s1 + $0x10] sm:$0xff]
        %v386 = vld [vmem:[%s1 + $0x18] sm:$0xff]
        %vm387 = vcmask 261120
        %v389 = vsel %vm387, %v382, 0
        %391 = vmatpush.msra.mxu0 0.0
        %392 = vmatpush.msra.mxu0 0.0
        %393 = vmatpush.msra.mxu0 0.0
        %394 = vmatpush.msra.mxu0 0.0
        %395 = vmatpush.msra.mxu0 0.0
        %396 = vmatpush.msra.mxu0 0.0
        %397 = vmatpush.msra.mxu0 0.0
        %398 = vmatpush.msra.mxu0 0.0
        %399 = vmatpush.msra.mxu0 0.0
        %400 = vmatpush.msra.mxu0 0.0
        %401 = vmatpush.msra.mxu0 0.0
        %402 = vmatpush.msra.mxu0 0.0
        %403 = vmatpush.msra.mxu0 %v386
        %404 = vmatpush.msra.mxu0 %v385
        %405 = vmatpush.msra.mxu0 %v384
        %406 = vmatpush.msra.mxu0 %v383
        %407 = vmatmul.f32.gmra.mxu0 %v389
        %v408 = vpop.f32.mrf.mxu0
        %v409 = vadd.f32 0.0, %v408
        %410 = vdwg.mxu0
        %v411 = vld [vmem:[%s2] sm:$0xff]
        %v412 = vld [vmem:[%s2 + $0x8] sm:$0xff]
        %v413 = vld [vmem:[%s2 + $0x10] sm:$0xff]
        %v414 = vld [vmem:[%s2 + $0x18] sm:$0xff]
        %415 = vmatpush.msra.mxu0 0.0
        %416 = vmatpush.msra.mxu0 0.0
        %417 = vmatpush.msra.mxu0 0.0
        %418 = vmatpush.msra.mxu0 0.0
        %419 = vmatpush.msra.mxu0 0.0
        %420 = vmatpush.msra.mxu0 0.0
        %421 = vmatpush.msra.mxu0 0.0
        %422 = vmatpush.msra.mxu0 0.0
        %423 = vmatpush.msra.mxu0 0.0
        %424 = vmatpush.msra.mxu0 0.0
        %425 = vmatpush.msra.mxu0 0.0
        %426 = vmatpush.msra.mxu0 0.0
        %427 = vmatpush.msra.mxu0 %v414
        %428 = vmatpush.msra.mxu0 %v413
        %429 = vmatpush.msra.mxu0 %v412
        %430 = vmatpush.msra.mxu0 %v411
        %431 = vmatmul.f32.gmra.mxu0 %v389
        %v432 = vpop.f32.mrf.mxu0
        %v433 = vadd.f32 0.0, %v432
        %434 = vdwg.mxu0
        %v435 = vld [vmem:[%s3] sm:$0xff]
        %v436 = vld [vmem:[%s3 + $0x8] sm:$0xff]
        %v437 = vld [vmem:[%s3 + $0x10] sm:$0xff]
        %v438 = vld [vmem:[%s3 + $0x18] sm:$0xff]
        %439 = vmatpush.msra.mxu0 0.0
        %440 = vmatpush.msra.mxu0 0.0
        %441 = vmatpush.msra.mxu0 0.0
        %442 = vmatpush.msra.mxu0 0.0
        %443 = vmatpush.msra.mxu0 0.0
        %444 = vmatpush.msra.mxu0 0.0
        %445 = vmatpush.msra.mxu0 0.0
        %446 = vmatpush.msra.mxu0 0.0
        %447 = vmatpush.msra.mxu0 0.0
        %448 = vmatpush.msra.mxu0 0.0
        %449 = vmatpush.msra.mxu0 0.0
        %450 = vmatpush.msra.mxu0 0.0
        %451 = vmatpush.msra.mxu0 %v438
        %452 = vmatpush.msra.mxu0 %v437
        %453 = vmatpush.msra.mxu0 %v436
        %454 = vmatpush.msra.mxu0 %v435
        %455 = vmatmul.f32.gmra.mxu0 %v389
        %v456 = vpop.f32.mrf.mxu0
        %v457 = vadd.f32 0.0, %v456
        %458 = vdwg.mxu0
        %s459 = scalar_lea.vmem %s1, 32
        %v460 = vld [vmem:[%s459] sm:$0xff]
        %v461 = vld [vmem:[%s459 + $0x8] sm:$0xff]
        %v462 = vld [vmem:[%s459 + $0x10] sm:$0xff]
        %v463 = vld [vmem:[%s459 + $0x18] sm:$0xff]
        %464 = vmatpush.msra.mxu0 0.0
        %465 = vmatpush.msra.mxu0 0.0
        %466 = vmatpush.msra.mxu0 0.0
        %467 = vmatpush.msra.mxu0 0.0
        %468 = vmatpush.msra.mxu0 0.0
        %469 = vmatpush.msra.mxu0 0.0
        %470 = vmatpush.msra.mxu0 0.0
        %471 = vmatpush.msra.mxu0 0.0
        %472 = vmatpush.msra.mxu0 0.0
        %473 = vmatpush.msra.mxu0 0.0
        %474 = vmatpush.msra.mxu0 0.0
        %475 = vmatpush.msra.mxu0 0.0
        %476 = vmatpush.msra.mxu0 %v463
        %477 = vmatpush.msra.mxu0 %v462
        %478 = vmatpush.msra.mxu0 %v461
        %479 = vmatpush.msra.mxu0 %v460
        %480 = vmatmul.f32.gmra.mxu0 %v389
        %v481 = vpop.f32.mrf.mxu0
        %v482 = vadd.f32 0.0, %v481
        %483 = vdwg.mxu0
        %s484 = scalar_lea.vmem %s2, 32
        %v485 = vld [vmem:[%s484] sm:$0xff]
        %v486 = vld [vmem:[%s484 + $0x8] sm:$0xff]
        %v487 = vld [vmem:[%s484 + $0x10] sm:$0xff]
        %v488 = vld [vmem:[%s484 + $0x18] sm:$0xff]
        %489 = vmatpush.msra.mxu0 0.0
        %490 = vmatpush.msra.mxu0 0.0
        %491 = vmatpush.msra.mxu0 0.0
        %492 = vmatpush.msra.mxu0 0.0
        %493 = vmatpush.msra.mxu0 0.0
        %494 = vmatpush.msra.mxu0 0.0
        %495 = vmatpush.msra.mxu0 0.0
        %496 = vmatpush.msra.mxu0 0.0
        %497 = vmatpush.msra.mxu0 0.0
        %498 = vmatpush.msra.mxu0 0.0
        %499 = vmatpush.msra.mxu0 0.0
        %500 = vmatpush.msra.mxu0 0.0
        %501 = vmatpush.msra.mxu0 %v488
        %502 = vmatpush.msra.mxu0 %v487
        %503 = vmatpush.msra.mxu0 %v486
        %504 = vmatpush.msra.mxu0 %v485
        %505 = vmatmul.f32.gmra.mxu0 %v389
        %v506 = vpop.f32.mrf.mxu0
        %v507 = vadd.f32 0.0, %v506
        %508 = vdwg.mxu0
        %s509 = scalar_lea.vmem %s3, 32
        %v510 = vld [vmem:[%s509] sm:$0xff]
        %v511 = vld [vmem:[%s509 + $0x8] sm:$0xff]
        %v512 = vld [vmem:[%s509 + $0x10] sm:$0xff]
        %v513 = vld [vmem:[%s509 + $0x18] sm:$0xff]
        %514 = vmatpush.msra.mxu0 0.0
        %515 = vmatpush.msra.mxu0 0.0
        %516 = vmatpush.msra.mxu0 0.0
        %517 = vmatpush.msra.mxu0 0.0
        %518 = vmatpush.msra.mxu0 0.0
        %519 = vmatpush.msra.mxu0 0.0
        %520 = vmatpush.msra.mxu0 0.0
        %521 = vmatpush.msra.mxu0 0.0
        %522 = vmatpush.msra.mxu0 0.0
        %523 = vmatpush.msra.mxu0 0.0
        %524 = vmatpush.msra.mxu0 0.0
        %525 = vmatpush.msra.mxu0 0.0
        %526 = vmatpush.msra.mxu0 %v513
        %527 = vmatpush.msra.mxu0 %v512
        %528 = vmatpush.msra.mxu0 %v511
        %529 = vmatpush.msra.mxu0 %v510
        %530 = vmatmul.f32.gmra.mxu0 %v389
        %v531 = vpop.f32.mrf.mxu0
        %v532 = vadd.f32 0.0, %v531
        %533 = vdwg.mxu0
        %s534 = scalar_lea.vmem %s1, 64
        %v535 = vld [vmem:[%s534] sm:$0xff]
        %v536 = vld [vmem:[%s534 + $0x8] sm:$0xff]
        %v537 = vld [vmem:[%s534 + $0x10] sm:$0xff]
        %v538 = vld [vmem:[%s534 + $0x18] sm:$0xff]
        %539 = vmatpush.msra.mxu0 0.0
        %540 = vmatpush.msra.mxu0 0.0
        %541 = vmatpush.msra.mxu0 0.0
        %542 = vmatpush.msra.mxu0 0.0
        %543 = vmatpush.msra.mxu0 0.0
        %544 = vmatpush.msra.mxu0 0.0
        %545 = vmatpush.msra.mxu0 0.0
        %546 = vmatpush.msra.mxu0 0.0
        %547 = vmatpush.msra.mxu0 0.0
        %548 = vmatpush.msra.mxu0 0.0
        %549 = vmatpush.msra.mxu0 0.0
        %550 = vmatpush.msra.mxu0 0.0
        %551 = vmatpush.msra.mxu0 %v538
        %552 = vmatpush.msra.mxu0 %v537
        %553 = vmatpush.msra.mxu0 %v536
        %554 = vmatpush.msra.mxu0 %v535
        %555 = vmatmul.f32.gmra.mxu0 %v389
        %v556 = vpop.f32.mrf.mxu0
        %v557 = vadd.f32 0.0, %v556
        %558 = vdwg.mxu0
        %s559 = scalar_lea.vmem %s2, 64
        %v560 = vld [vmem:[%s559] sm:$0xff]
        %v561 = vld [vmem:[%s559 + $0x8] sm:$0xff]
        %v562 = vld [vmem:[%s559 + $0x10] sm:$0xff]
        %v563 = vld [vmem:[%s559 + $0x18] sm:$0xff]
        %564 = vmatpush.msra.mxu0 0.0
        %565 = vmatpush.msra.mxu0 0.0
        %566 = vmatpush.msra.mxu0 0.0
        %567 = vmatpush.msra.mxu0 0.0
        %568 = vmatpush.msra.mxu0 0.0
        %569 = vmatpush.msra.mxu0 0.0
        %570 = vmatpush.msra.mxu0 0.0
        %571 = vmatpush.msra.mxu0 0.0
        %572 = vmatpush.msra.mxu0 0.0
        %573 = vmatpush.msra.mxu0 0.0
        %574 = vmatpush.msra.mxu0 0.0
        %575 = vmatpush.msra.mxu0 0.0
        %576 = vmatpush.msra.mxu0 %v563
        %577 = vmatpush.msra.mxu0 %v562
        %578 = vmatpush.msra.mxu0 %v561
        %579 = vmatpush.msra.mxu0 %v560
        %580 = vmatmul.f32.gmra.mxu0 %v389
        %v581 = vpop.f32.mrf.mxu0
        %v582 = vadd.f32 0.0, %v581
        %583 = vdwg.mxu0
        %s584 = scalar_lea.vmem %s3, 64
        %v585 = vld [vmem:[%s584] sm:$0xff]
        %v586 = vld [vmem:[%s584 + $0x8] sm:$0xff]
        %v587 = vld [vmem:[%s584 + $0x10] sm:$0xff]
        %v588 = vld [vmem:[%s584 + $0x18] sm:$0xff]
        %589 = vmatpush.msra.mxu0 0.0
        %590 = vmatpush.msra.mxu0 0.0
        %591 = vmatpush.msra.mxu0 0.0
        %592 = vmatpush.msra.mxu0 0.0
        %593 = vmatpush.msra.mxu0 0.0
        %594 = vmatpush.msra.mxu0 0.0
        %595 = vmatpush.msra.mxu0 0.0
        %596 = vmatpush.msra.mxu0 0.0
        %597 = vmatpush.msra.mxu0 0.0
        %598 = vmatpush.msra.mxu0 0.0
        %599 = vmatpush.msra.mxu0 0.0
        %600 = vmatpush.msra.mxu0 0.0
        %601 = vmatpush.msra.mxu0 %v588
        %602 = vmatpush.msra.mxu0 %v587
        %603 = vmatpush.msra.mxu0 %v586
        %604 = vmatpush.msra.mxu0 %v585
        %605 = vmatmul.f32.gmra.mxu0 %v389
        %v606 = vpop.f32.mrf.mxu0
        %v607 = vadd.f32 0.0, %v606
        %608 = vdwg.mxu0
        %s609 = scalar_lea.vmem %s1, 96
        %v610 = vld [vmem:[%s609] sm:$0xff]
        %v611 = vld [vmem:[%s609 + $0x8] sm:$0xff]
        %v612 = vld [vmem:[%s609 + $0x10] sm:$0xff]
        %v613 = vld [vmem:[%s609 + $0x18] sm:$0xff]
        %614 = vmatpush.msra.mxu0 0.0
        %615 = vmatpush.msra.mxu0 0.0
        %616 = vmatpush.msra.mxu0 0.0
        %617 = vmatpush.msra.mxu0 0.0
        %618 = vmatpush.msra.mxu0 0.0
        %619 = vmatpush.msra.mxu0 0.0
        %620 = vmatpush.msra.mxu0 0.0
        %621 = vmatpush.msra.mxu0 0.0
        %622 = vmatpush.msra.mxu0 0.0
        %623 = vmatpush.msra.mxu0 0.0
        %624 = vmatpush.msra.mxu0 0.0
        %625 = vmatpush.msra.mxu0 0.0
        %626 = vmatpush.msra.mxu0 %v613
        %627 = vmatpush.msra.mxu0 %v612
        %628 = vmatpush.msra.mxu0 %v611
        %629 = vmatpush.msra.mxu0 %v610
        %630 = vmatmul.f32.gmra.mxu0 %v389
        %v631 = vpop.f32.mrf.mxu0
        %v632 = vadd.f32 0.0, %v631
        %633 = vdwg.mxu0
        %s634 = scalar_lea.vmem %s2, 96
        %v635 = vld [vmem:[%s634] sm:$0xff]
        %v636 = vld [vmem:[%s634 + $0x8] sm:$0xff]
        %v637 = vld [vmem:[%s634 + $0x10] sm:$0xff]
        %v638 = vld [vmem:[%s634 + $0x18] sm:$0xff]
        %639 = vmatpush.msra.mxu0 0.0
        %640 = vmatpush.msra.mxu0 0.0
        %641 = vmatpush.msra.mxu0 0.0
        %642 = vmatpush.msra.mxu0 0.0
        %643 = vmatpush.msra.mxu0 0.0
        %644 = vmatpush.msra.mxu0 0.0
        %645 = vmatpush.msra.mxu0 0.0
        %646 = vmatpush.msra.mxu0 0.0
        %647 = vmatpush.msra.mxu0 0.0
        %648 = vmatpush.msra.mxu0 0.0
        %649 = vmatpush.msra.mxu0 0.0
        %650 = vmatpush.msra.mxu0 0.0
        %651 = vmatpush.msra.mxu0 %v638
        %652 = vmatpush.msra.mxu0 %v637
        %653 = vmatpush.msra.mxu0 %v636
        %654 = vmatpush.msra.mxu0 %v635
        %655 = vmatmul.f32.gmra.mxu0 %v389
        %v656 = vpop.f32.mrf.mxu0
        %v657 = vadd.f32 0.0, %v656
        %658 = vdwg.mxu0
        %s659 = scalar_lea.vmem %s3, 96
        %v660 = vld [vmem:[%s659] sm:$0xff]
        %v661 = vld [vmem:[%s659 + $0x8] sm:$0xff]
        %v662 = vld [vmem:[%s659 + $0x10] sm:$0xff]
        %v663 = vld [vmem:[%s659 + $0x18] sm:$0xff]
        %664 = vmatpush.msra.mxu0 0.0
        %665 = vmatpush.msra.mxu0 0.0
        %666 = vmatpush.msra.mxu0 0.0
        %667 = vmatpush.msra.mxu0 0.0
        %668 = vmatpush.msra.mxu0 0.0
        %669 = vmatpush.msra.mxu0 0.0
        %670 = vmatpush.msra.mxu0 0.0
        %671 = vmatpush.msra.mxu0 0.0
        %672 = vmatpush.msra.mxu0 0.0
        %673 = vmatpush.msra.mxu0 0.0
        %674 = vmatpush.msra.mxu0 0.0
        %675 = vmatpush.msra.mxu0 0.0
        %676 = vmatpush.msra.mxu0 %v663
        %677 = vmatpush.msra.mxu0 %v662
        %678 = vmatpush.msra.mxu0 %v661
        %679 = vmatpush.msra.mxu0 %v660
        %680 = vmatmul.f32.gmra.mxu0 %v389
        %v681 = vpop.f32.mrf.mxu0
        %v682 = vadd.f32 0.0, %v681
        %683 = vdwg.mxu0
        %v684 = vld [vmem:[%s4] sm:$0x1]
        %v685 = vld [vmem:[%s4 + $0x1] sm:$0x1]
        %v686 = vld [vmem:[%s4 + $0x2] sm:$0x1]
        %v687 = vld [vmem:[%s4 + $0x3] sm:$0x1]
        %v692 = vperm.slane %v684, 0
        %v693 = vperm.slane %v685, 0
        %v694 = vperm.slane %v686, 0
        %v695 = vperm.slane %v687, 0
        %v700 = vadd.f32 %v409, %v692
        %v701 = vadd.f32 %v482, %v693
        %v702 = vadd.f32 %v557, %v694
        %v703 = vadd.f32 %v632, %v695
        %v704 = vld [vmem:[%s5] sm:$0x1]
        %v705 = vld [vmem:[%s5 + $0x1] sm:$0x1]
        %v706 = vld [vmem:[%s5 + $0x2] sm:$0x1]
        %v707 = vld [vmem:[%s5 + $0x3] sm:$0x1]
        %v712 = vperm.slane %v704, 0
        %v713 = vperm.slane %v705, 0
        %v714 = vperm.slane %v706, 0
        %v715 = vperm.slane %v707, 0
        %v720 = vadd.f32 %v433, %v712
        %v721 = vadd.f32 %v507, %v713
        %v722 = vadd.f32 %v582, %v714
        %v723 = vadd.f32 %v657, %v715
        %v724 = vld [vmem:[%s6] sm:$0x1]
        %v725 = vld [vmem:[%s6 + $0x1] sm:$0x1]
        %v726 = vld [vmem:[%s6 + $0x2] sm:$0x1]
        %v727 = vld [vmem:[%s6 + $0x3] sm:$0x1]
        %v732 = vperm.slane %v724, 0
        %v733 = vperm.slane %v725, 0
        %v734 = vperm.slane %v726, 0
        %v735 = vperm.slane %v727, 0
        %v740 = vadd.f32 %v457, %v732
        %v741 = vadd.f32 %v532, %v733
        %v742 = vadd.f32 %v607, %v734
        %v743 = vadd.f32 %v682, %v735
        %vm744 = vcmask 64512
        %v746 = vsel %vm744, %v700, 0
        %v749 = vsel %vm744, %v720, 0
        %751 = vmatpush.xpose.msra.mxu0 0.0
        %752 = vmatpush.xpose.msra.mxu0 0.0
        %753 = vmatpush.xpose.msra.mxu0 0.0
        %754 = vmatpush.xpose.msra.mxu0 0.0
        %755 = vmatpush.xpose.msra.mxu0 0.0
        %756 = vmatpush.xpose.msra.mxu0 0.0
        %757 = vmatpush.xpose.msra.mxu0 0.0
        %758 = vmatpush.xpose.msra.mxu0 0.0
        %759 = vmatpush.xpose.msra.mxu0 0.0
        %760 = vmatpush.xpose.msra.mxu0 0.0
        %761 = vmatpush.xpose.msra.mxu0 0.0
        %762 = vmatpush.xpose.msra.mxu0 0.0
        %763 = vmatpush.xpose.msra.mxu0 0.0
        %764 = vmatpush.xpose.msra.mxu0 0.0
        %765 = vmatpush.xpose.msra.mxu0 0.0
        %766 = vmatpush.xpose.msra.mxu0 %v749
        %767 = vmatmul.f32.gmra.mxu0 %v746
        %v768 = vpop.f32.mrf.mxu0
        %v769 = vadd.f32 0.0, %v768
        %770 = vdwg.mxu0
        %v772 = vsel %vm744, %v701, 0
        %v775 = vsel %vm744, %v721, 0
        %777 = vmatpush.xpose.msra.mxu0 0.0
        %778 = vmatpush.xpose.msra.mxu0 0.0
        %779 = vmatpush.xpose.msra.mxu0 0.0
        %780 = vmatpush.xpose.msra.mxu0 0.0
        %781 = vmatpush.xpose.msra.mxu0 0.0
        %782 = vmatpush.xpose.msra.mxu0 0.0
        %783 = vmatpush.xpose.msra.mxu0 0.0
        %784 = vmatpush.xpose.msra.mxu0 0.0
        %785 = vmatpush.xpose.msra.mxu0 0.0
        %786 = vmatpush.xpose.msra.mxu0 0.0
        %787 = vmatpush.xpose.msra.mxu0 0.0
        %788 = vmatpush.xpose.msra.mxu0 0.0
        %789 = vmatpush.xpose.msra.mxu0 0.0
        %790 = vmatpush.xpose.msra.mxu0 0.0
        %791 = vmatpush.xpose.msra.mxu0 0.0
        %792 = vmatpush.xpose.msra.mxu0 %v775
        %793 = vmatmul.f32.gmra.mxu0 %v772
        %v794 = vpop.f32.mrf.mxu0
        %v795 = vadd.f32 0.0, %v794
        %796 = vdwg.mxu0
        %v798 = vsel %vm744, %v702, 0
        %v801 = vsel %vm744, %v722, 0
        %803 = vmatpush.xpose.msra.mxu0 0.0
        %804 = vmatpush.xpose.msra.mxu0 0.0
        %805 = vmatpush.xpose.msra.mxu0 0.0
        %806 = vmatpush.xpose.msra.mxu0 0.0
        %807 = vmatpush.xpose.msra.mxu0 0.0
        %808 = vmatpush.xpose.msra.mxu0 0.0
        %809 = vmatpush.xpose.msra.mxu0 0.0
        %810 = vmatpush.xpose.msra.mxu0 0.0
        %811 = vmatpush.xpose.msra.mxu0 0.0
        %812 = vmatpush.xpose.msra.mxu0 0.0
        %813 = vmatpush.xpose.msra.mxu0 0.0
        %814 = vmatpush.xpose.msra.mxu0 0.0
        %815 = vmatpush.xpose.msra.mxu0 0.0
        %816 = vmatpush.xpose.msra.mxu0 0.0
        %817 = vmatpush.xpose.msra.mxu0 0.0
        %818 = vmatpush.xpose.msra.mxu0 %v801
        %819 = vmatmul.f32.gmra.mxu0 %v798
        %v820 = vpop.f32.mrf.mxu0
        %v821 = vadd.f32 0.0, %v820
        %822 = vdwg.mxu0
        %v824 = vsel %vm744, %v703, 0
        %v827 = vsel %vm744, %v723, 0
        %829 = vmatpush.xpose.msra.mxu0 0.0
        %830 = vmatpush.xpose.msra.mxu0 0.0
        %831 = vmatpush.xpose.msra.mxu0 0.0
        %832 = vmatpush.xpose.msra.mxu0 0.0
        %833 = vmatpush.xpose.msra.mxu0 0.0
        %834 = vmatpush.xpose.msra.mxu0 0.0
        %835 = vmatpush.xpose.msra.mxu0 0.0
        %836 = vmatpush.xpose.msra.mxu0 0.0
        %837 = vmatpush.xpose.msra.mxu0 0.0
        %838 = vmatpush.xpose.msra.mxu0 0.0
        %839 = vmatpush.xpose.msra.mxu0 0.0
        %840 = vmatpush.xpose.msra.mxu0 0.0
        %841 = vmatpush.xpose.msra.mxu0 0.0
        %842 = vmatpush.xpose.msra.mxu0 0.0
        %843 = vmatpush.xpose.msra.mxu0 0.0
        %844 = vmatpush.xpose.msra.mxu0 %v827
        %845 = vmatmul.f32.gmra.mxu0 %v824
        %v846 = vpop.f32.mrf.mxu0
        %v847 = vadd.f32 0.0, %v846
        %848 = vdwg.mxu0
        %v849 = vmul.f32 %v769, 0.35355338
        %v850 = vmul.f32 %v795, 0.35355338
        %v851 = vmul.f32 %v821, 0.35355338
        %v852 = vmul.f32 %v847, 0.35355338
        %v853 = vsel %vm744, %v849, -inf
        %854 = vmax.xlane.f32.xlu0 %v853
        %v855 = vpop.xlane.xlu0 %854
        %v856 = vsel %vm744, %v850, -inf
        %857 = vmax.xlane.f32.xlu0 %v856
        %v858 = vpop.xlane.xlu0 %857
        %v859 = vsel %vm744, %v851, -inf
        %860 = vmax.xlane.f32.xlu0 %v859
        %v861 = vpop.xlane.xlu0 %860
        %v862 = vsel %vm744, %v852, -inf
        %863 = vmax.xlane.f32.xlu0 %v862
        %v864 = vpop.xlane.xlu0 %863
        %v865 = vsub.f32 %v849, %v855
        %v866 = vsub.f32 %v850, %v858
        %v867 = vsub.f32 %v851, %v861
        %v868 = vsub.f32 %v852, %v864
        %v869 = vmul.f32 %v865, 1.442695
        %v870 = vpow.pop %v869
        %v871 = vmul.f32 %v866, 1.442695
        %v872 = vpow.pop %v871
        %v873 = vmul.f32 %v867, 1.442695
        %v874 = vpow.pop %v873
        %v875 = vmul.f32 %v868, 1.442695
        %v876 = vpow.pop %v875
        %v877 = vsel %vm744, %v870, 0.0
        %878 = vadd.xlane.f32.xlu0 %v877
        %v879 = vpop.xlane.xlu0 %878
        %v880 = vsel %vm744, %v872, 0.0
        %881 = vadd.xlane.f32.xlu0 %v880
        %v882 = vpop.xlane.xlu0 %881
        %v883 = vsel %vm744, %v874, 0.0
        %884 = vadd.xlane.f32.xlu0 %v883
        %v885 = vpop.xlane.xlu0 %884
        %v886 = vsel %vm744, %v876, 0.0
        %887 = vadd.xlane.f32.xlu0 %v886
        %v888 = vpop.xlane.xlu0 %887
        %v889 = vrcp.pop %v879
        %v890 = vrcp.pop %v882
        %v891 = vrcp.pop %v885
        %v892 = vrcp.pop %v888
        %v893 = vmul.f32 %v870, %v889
        %v894 = vmul.f32 %v872, %v890
        %v895 = vmul.f32 %v874, %v891
        %v896 = vmul.f32 %v876, %v892
        %v898 = vsel %vm744, %v893, 0
        %900 = vmatpush.msra.mxu0 0.0
        %901 = vmatpush.msra.mxu0 0.0
        %902 = vmatpush.msra.mxu0 0.0
        %903 = vmatpush.msra.mxu0 0.0
        %904 = vmatpush.msra.mxu0 0.0
        %905 = vmatpush.msra.mxu0 0.0
        %906 = vmatpush.msra.mxu0 0.0
        %907 = vmatpush.msra.mxu0 0.0
        %908 = vmatpush.msra.mxu0 0.0
        %909 = vmatpush.msra.mxu0 0.0
        %910 = vmatpush.msra.mxu0 0.0
        %911 = vmatpush.msra.mxu0 0.0
        %912 = vmatpush.msra.mxu0 0.0
        %913 = vmatpush.msra.mxu0 0.0
        %914 = vmatpush.msra.mxu0 0.0
        %915 = vmatpush.msra.mxu0 %v740
        %916 = vmatmul.f32.gmra.mxu0 %v898
        %v917 = vpop.f32.mrf.mxu0
        %v918 = vadd.f32 0.0, %v917
        %919 = vdwg.mxu0
        %v921 = vsel %vm744, %v894, 0
        %923 = vmatpush.msra.mxu0 0.0
        %924 = vmatpush.msra.mxu0 0.0
        %925 = vmatpush.msra.mxu0 0.0
        %926 = vmatpush.msra.mxu0 0.0
        %927 = vmatpush.msra.mxu0 0.0
        %928 = vmatpush.msra.mxu0 0.0
        %929 = vmatpush.msra.mxu0 0.0
        %930 = vmatpush.msra.mxu0 0.0
        %931 = vmatpush.msra.mxu0 0.0
        %932 = vmatpush.msra.mxu0 0.0
        %933 = vmatpush.msra.mxu0 0.0
        %934 = vmatpush.msra.mxu0 0.0
        %935 = vmatpush.msra.mxu0 0.0
        %936 = vmatpush.msra.mxu0 0.0
        %937 = vmatpush.msra.mxu0 0.0
        %938 = vmatpush.msra.mxu0 %v741
        %939 = vmatmul.f32.gmra.mxu0 %v921
        %v940 = vpop.f32.mrf.mxu0
        %v941 = vadd.f32 0.0, %v940
        %942 = vdwg.mxu0
        %v944 = vsel %vm744, %v895, 0
        %946 = vmatpush.msra.mxu0 0.0
        %947 = vmatpush.msra.mxu0 0.0
        %948 = vmatpush.msra.mxu0 0.0
        %949 = vmatpush.msra.mxu0 0.0
        %950 = vmatpush.msra.mxu0 0.0
        %951 = vmatpush.msra.mxu0 0.0
        %952 = vmatpush.msra.mxu0 0.0
        %953 = vmatpush.msra.mxu0 0.0
        %954 = vmatpush.msra.mxu0 0.0
        %955 = vmatpush.msra.mxu0 0.0
        %956 = vmatpush.msra.mxu0 0.0
        %957 = vmatpush.msra.mxu0 0.0
        %958 = vmatpush.msra.mxu0 0.0
        %959 = vmatpush.msra.mxu0 0.0
        %960 = vmatpush.msra.mxu0 0.0
        %961 = vmatpush.msra.mxu0 %v742
        %962 = vmatmul.f32.gmra.mxu0 %v944
        %v963 = vpop.f32.mrf.mxu0
        %v964 = vadd.f32 0.0, %v963
        %965 = vdwg.mxu0
        %v967 = vsel %vm744, %v896, 0
        %969 = vmatpush.msra.mxu0 0.0
        %970 = vmatpush.msra.mxu0 0.0
        %971 = vmatpush.msra.mxu0 0.0
        %972 = vmatpush.msra.mxu0 0.0
        %973 = vmatpush.msra.mxu0 0.0
        %974 = vmatpush.msra.mxu0 0.0
        %975 = vmatpush.msra.mxu0 0.0
        %976 = vmatpush.msra.mxu0 0.0
        %977 = vmatpush.msra.mxu0 0.0
        %978 = vmatpush.msra.mxu0 0.0
        %979 = vmatpush.msra.mxu0 0.0
        %980 = vmatpush.msra.mxu0 0.0
        %981 = vmatpush.msra.mxu0 0.0
        %982 = vmatpush.msra.mxu0 0.0
        %983 = vmatpush.msra.mxu0 0.0
        %984 = vmatpush.msra.mxu0 %v743
        %985 = vmatmul.f32.gmra.mxu0 %v967
        %v986 = vpop.f32.mrf.mxu0
        %v987 = vadd.f32 0.0, %v986
        %988 = vdwg.mxu0
        %v989 = vld [vmem:[%s7] sm:$0xff]
        %s990 = scalar_lea.vmem %s7, 8
        %v991 = vld [vmem:[%s990] sm:$0xff]
        %v993 = vsel %vm744, %v941, 0
        %995 = vmatpush.msra.mxu0 0.0
        %996 = vmatpush.msra.mxu0 0.0
        %997 = vmatpush.msra.mxu0 0.0
        %998 = vmatpush.msra.mxu0 0.0
        %999 = vmatpush.msra.mxu0 0.0
        %1000 = vmatpush.msra.mxu0 0.0
        %1001 = vmatpush.msra.mxu0 0.0
        %1002 = vmatpush.msra.mxu0 0.0
        %1003 = vmatpush.msra.mxu0 0.0
        %1004 = vmatpush.msra.mxu0 0.0
        %1005 = vmatpush.msra.mxu0 0.0
        %1006 = vmatpush.msra.mxu0 0.0
        %1007 = vmatpush.msra.mxu0 0.0
        %1008 = vmatpush.msra.mxu0 0.0
        %1009 = vmatpush.msra.mxu0 0.0
        %1010 = vmatpush.msra.mxu0 %v991
        %1011 = vmatmul.f32.gmra.mxu0 %v993
        %v1012 = vpop.f32.mrf.mxu0
        %v1013 = vadd.f32 0.0, %v1012
        %1014 = vdwg.mxu0
        %v1016 = vsel %vm744, %v918, 0
        %1018 = vmatpush.msra.mxu0 0.0
        %1019 = vmatpush.msra.mxu0 0.0
        %1020 = vmatpush.msra.mxu0 0.0
        %1021 = vmatpush.msra.mxu0 0.0
        %1022 = vmatpush.msra.mxu0 0.0
        %1023 = vmatpush.msra.mxu0 0.0
        %1024 = vmatpush.msra.mxu0 0.0
        %1025 = vmatpush.msra.mxu0 0.0
        %1026 = vmatpush.msra.mxu0 0.0
        %1027 = vmatpush.msra.mxu0 0.0
        %1028 = vmatpush.msra.mxu0 0.0
        %1029 = vmatpush.msra.mxu0 0.0
        %1030 = vmatpush.msra.mxu0 0.0
        %1031 = vmatpush.msra.mxu0 0.0
        %1032 = vmatpush.msra.mxu0 0.0
        %1033 = vmatpush.msra.mxu0 %v989
        %1034 = vmatmul.f32.gmra.mxu0 %v1016
        %v1035 = vpop.f32.mrf.mxu0
        %v1036 = vadd.f32 %v1013, %v1035
        %1037 = vdwg.mxu0
        %s1038 = scalar_lea.vmem %s7, 16
        %v1039 = vld [vmem:[%s1038] sm:$0xff]
        %v1041 = vsel %vm744, %v964, 0
        %1043 = vmatpush.msra.mxu0 0.0
        %1044 = vmatpush.msra.mxu0 0.0
        %1045 = vmatpush.msra.mxu0 0.0
        %1046 = vmatpush.msra.mxu0 0.0
        %1047 = vmatpush.msra.mxu0 0.0
        %1048 = vmatpush.msra.mxu0 0.0
        %1049 = vmatpush.msra.mxu0 0.0
        %1050 = vmatpush.msra.mxu0 0.0
        %1051 = vmatpush.msra.mxu0 0.0
        %1052 = vmatpush.msra.mxu0 0.0
        %1053 = vmatpush.msra.mxu0 0.0
        %1054 = vmatpush.msra.mxu0 0.0
        %1055 = vmatpush.msra.mxu0 0.0
        %1056 = vmatpush.msra.mxu0 0.0
        %1057 = vmatpush.msra.mxu0 0.0
        %1058 = vmatpush.msra.mxu0 %v1039
        %1059 = vmatmul.f32.gmra.mxu0 %v1041
        %v1060 = vpop.f32.mrf.mxu0
        %v1061 = vadd.f32 0.0, %v1060
        %1062 = vdwg.mxu0
        %v1063 = vadd.f32 %v1036, %v1061
        %s1064 = scalar_lea.vmem %s7, 24
        %v1065 = vld [vmem:[%s1064] sm:$0xff]
        %v1067 = vsel %vm744, %v987, 0
        %1069 = vmatpush.msra.mxu0 0.0
        %1070 = vmatpush.msra.mxu0 0.0
        %1071 = vmatpush.msra.mxu0 0.0
        %1072 = vmatpush.msra.mxu0 0.0
        %1073 = vmatpush.msra.mxu0 0.0
        %1074 = vmatpush.msra.mxu0 0.0
        %1075 = vmatpush.msra.mxu0 0.0
        %1076 = vmatpush.msra.mxu0 0.0
        %1077 = vmatpush.msra.mxu0 0.0
        %1078 = vmatpush.msra.mxu0 0.0
        %1079 = vmatpush.msra.mxu0 0.0
        %1080 = vmatpush.msra.mxu0 0.0
        %1081 = vmatpush.msra.mxu0 0.0
        %1082 = vmatpush.msra.mxu0 0.0
        %1083 = vmatpush.msra.mxu0 0.0
        %1084 = vmatpush.msra.mxu0 %v1065
        %1085 = vmatmul.f32.gmra.mxu0 %v1067
        %v1086 = vpop.f32.mrf.mxu0
        %v1087 = vadd.f32 0.0, %v1086
        %1088 = vdwg.mxu0
        %v1089 = vadd.f32 %v1063, %v1087
        %v1090 = vld [vmem:[%s8] sm:$0x1]
        %v1092 = vperm.slane %v1090, 0
        %v1094 = vadd.f32 %v1089, %v1092
        %v1095 = vadd.f32 %v382, %v1094
        %v1096 = vsel %vm387, %v1095, 0.0
        %1097 = vadd.xlane.f32.xlu0 %v1096
        %v1098 = vpop.xlane.xlu0 %1097
        %v1099 = vrcp.pop 32.0
        %v1100 = vmul.f32 32.0, %v1099
        %v1101 = vsub.f32 1.0, %v1100
        %v1102 = vmul.f32 %v1099, %v1101
        %v1103 = vadd.f32 %v1099, %v1102
        %vm1104 = vweird.f32 %v1099
        %v1105 = vsel %vm1104, %v1099, %v1103
        %v1106 = vmul.f32 %v1098, %v1105
        %v1107 = vmul.f32 %v1095, %v1095
        %v1108 = vsel %vm387, %v1107, 0.0
        %1109 = vadd.xlane.f32.xlu0 %v1108
        %v1110 = vpop.xlane.xlu0 %1109
        %v1111 = vmul.f32 %v1110, %v1105
        %v1112 = vmul.f32 %v1106, %v1106
        %v1113 = vsub.f32 %v1111, %v1112
        %v1114 = vmax.f32 %v1113, 0.0
        %v1115 = vsub.f32 %v1095, %v1106
        %v1116 = vadd.f32 %v1114, 1e-05
        %v1117 = vrsqrt.pop %v1116
        %v1118 = vmul.f32 %v1117, %v1116
        %v1119 = vmul.f32 %v1118, %v1117
        %v1120 = vmul.f32 0.5, %v1119
        %v1121 = vsub.f32 1.5, %v1120
        %v1122 = vmul.f32 %v1117, %v1121
        %vm1123 = vweird.f32 %v1116
        %vm1124 = vweird.f32 %v1117
        %vm1125 = vmor %vm1123, %vm1124
        %v1126 = vsel %vm1125, %v1117, %v1122
        %v1127 = vmul.f32 %v1115, %v1126
        %v1128 = vld [vmem:[%s9] sm:$0x1]
        %v1130 = vperm.slane %v1128, 0
        %v1132 = vmul.f32 %v1127, %v1130
        %v1133 = vld [vmem:[%s10] sm:$0x1]
        %v1135 = vperm.slane %v1133, 0
        %v1137 = vadd.f32 %v1132, %v1135
        %1138 = vst.msk [vmem:[%s377] sm:$0xff] %vm387, %v1137
        %s1139 = sand.u32 %s269, 1
        %s1140 = scalar_lea.sflag [#allocation3], %s1139
        %s1141 = sand.u32 %s269, 1
        %s1142 = smul.addr %s1141, 8
        %s1143 = scalar_lea.vmem [#allocation2], %s1142
        // Predicated region
        $region65: #{tpu_custom_call.1} parent=63 // pred_check
          %p1144 = pneg %p279
        $region66: #{tpu_custom_call.1} parent=63 // pred_check_branch
          %1146 = sbr.rel (%p1144) target = $region68
        $region67: #{tpu_custom_call.1} parent=63 // pred_region
          %1148 = vsyncadd %s1140, 0
          %s1149 = smul.addr %s25, 8
          %s1150 = scalar_lea.hbm %s11, %s1149
          %s1152 = sshll.u32 %s1143, 4
          %s1153 = int_to_ptr.vmem [resolvable:$true] %s1152
          %s1154 = sshll.u32 %s1150, 4
          %s1155 = int_to_ptr.hbm [resolvable:$true] %s1154
          %1157 = dma.vmem_to_hbm [thread:$0]  %s1153, 128, %s1155, %s1140
        $region68: #{tpu_custom_call.1} parent=63 // pred_fallthru
          _
      $region64: #{tpu_custom_call.1} parent=5 // pred_fallthru
        _
      %p1158 = scmp.le.s32.totalorder 2, %s20
      // Predicated region
      $region69: #{tpu_custom_call.1} parent=5 // pred_check
        %p1159 = pneg %p1158
      $region70: #{tpu_custom_call.1} parent=5 // pred_check_branch
        %1161 = sbr.rel (%p1159) target = $region72
      $region71: #{tpu_custom_call.1} parent=5 // pred_region
        %s1162 = ssub.s32 %s20, 2
        // Predicated region
        $region73: #{tpu_custom_call.1} parent=71 // pred_check
          %p1163 = pneg %p285
        $region74: #{tpu_custom_call.1} parent=71 // pred_check_branch
          %1165 = sbr.rel (%p1163) target = $region76
        $region75: #{tpu_custom_call.1} parent=71 // pred_region
          %s1166 = sand.u32 %s270, 1
          %s1167 = scalar_lea.sflag [#allocation3], %s1166
          %s1168 = sand.u32 %s270, 1
          %s1169 = smul.addr %s1168, 8
          %s1170 = scalar_lea.vmem [#allocation2], %s1169
          %1172 = dma.done %s1167, 128
        $region76: #{tpu_custom_call.1} parent=71 // pred_fallthru
          _
      $region72: #{tpu_custom_call.1} parent=5 // pred_fallthru
        _
    $region6: #{tpu_custom_call.1} parent=1 // loop_footer
      %s24 = sadd.s32 1, %s20
    $region7: #{tpu_custom_call.1} parent=1 // loop_footer_branch
      %19 = sbr.rel target = $region3
    $region8: #{tpu_custom_call.1} parent=1 // loop_exit
      _
    %1173 = vsyncpa [#allocation3], 1
    %s1174 = scalar_lea.sflag [#allocation3], 1
    %1175 = vsyncpa %s1174, 1

</llo_original>
